<compile_context>
chip_gen: v5e
topology: v5e:2x2
jax: 0.10.0
libtpu: 0.0.40
codegen_flags: <defaults>
</compile_context>

<pallas_src>
import functools

import jax
import jax.numpy as jnp
from jax.experimental import pallas as pl
from jax.experimental.pallas import tpu as pltpu

EPS = 1e-5
MXU_DTYPE = jnp.bfloat16   # MXU operand dtype (accumulation stays f32)
ACT_DTYPE = jnp.bfloat16   # HBM dtype of the inter-conv / pre-BN activations
FUSE_K_MAX = 256           # single K=9*Cin matmul while it fits the MXU depth


# ----------------------------------------------------------------------------- kernels


def _conv3x3_bn_stats_kernel(x_ref, *refs, apply_pre_bn_relu, fuse_kh):
    """3x3 'same' conv (+bias) on one batch block, optionally preceded by a
    per-channel affine + ReLU (the previous layer's BatchNorm), plus per-block
    centered BN statistics (block mean, centered sum-of-squares) of the conv
    output."""
    if apply_pre_bn_relu:
        s_ref, t_ref, w_ref, b_ref, y_ref, mean_ref, m2_ref = refs
    else:
        w_ref, b_ref, y_ref, mean_ref, m2_ref = refs

    nblk, H, W, Cin = x_ref.shape
    Cout = b_ref.shape[-1]
    M = nblk * H * W

    x = x_ref[...]
    if apply_pre_bn_relu:
        scale = s_ref[...].reshape(1, 1, 1, Cin)
        shift = t_ref[...].reshape(1, 1, 1, Cin)
        x = jnp.maximum(x.astype(jnp.float32) * scale + shift, 0.0)  # fused BN+ReLU
    # Cast to bf16 BEFORE building the im2col intermediates (halves intermediate
    # VMEM / vst traffic; the MXU operands were bf16 anyway).
    x = x.astype(MXU_DTYPE)

    # kw im2col in bf16: left / centre / right shifted copies (zero 'same'
    # boundary) concatenated along the channel (lane) axis, kw-major.
    zcol = jnp.zeros((nblk, H, 1, Cin), MXU_DTYPE)
    cols = jnp.concatenate(
        [jnp.concatenate([zcol, x[:, :, :W - 1, :]], axis=2),   # src x[., ., w-1, .]
         x,                                                     # src x[., ., w,   .]
         jnp.concatenate([x[:, :, 1:, :], zcol], axis=2)],      # src x[., ., w+1, .]
        axis=-1)                                                # (nblk, H, W, 3*Cin)
    # TODO(synk): the kw shifts could use pltpu.roll (XLU slot) + boundary mask
    # instead of concatenate if the vst/VALU slots ever become binding here.

    if fuse_kh:
        # Small Cin: all 9 taps along the channel axis -> ONE K=9*Cin matmul
        # (kh-major patch matches the (kh, kw, Cin, Cout) weight flattening).
        zrow = jnp.zeros((nblk, 1, W, 3 * Cin), MXU_DTYPE)
        patch = jnp.concatenate(
            [jnp.concatenate([zrow, cols[:, :H - 1]], axis=1),  # src cols[., h-1]
             cols,                                              # src cols[., h]
             jnp.concatenate([cols[:, 1:], zrow], axis=1)],     # src cols[., h+1]
            axis=-1).reshape(M, 9 * Cin)
        y = jnp.dot(patch, w_ref[...], preferred_element_type=jnp.float32)
    else:
        # General path: 3 matmuls of K=3*Cin against a single live im2col
        # buffer; shift the (Cout-wide) partial results along H (leading axis,
        # cheap block copy) instead of keeping 3 shifted copies of `cols`.
        flat = cols.reshape(M, 3 * Cin)
        p = [jnp.dot(flat, w_ref[kh], preferred_element_type=jnp.float32)
             .reshape(nblk, H, W, Cout) for kh in range(3)]
        zrow_o = jnp.zeros((nblk, 1, W, Cout), jnp.float32)
        y = (jnp.concatenate([zrow_o, p[0][:, :H - 1]], axis=1)   # y[h] += p0[h-1]
             + p[1]
             + jnp.concatenate([p[2][:, 1:], zrow_o], axis=1)     # y[h] += p2[h+1]
             ).reshape(M, Cout)

    y = y + b_ref[...]                                   # (M, Cout) pre-BN, f32

    # Pre-BN activation to HBM (bf16): halves the traffic of the dominant
    # intermediate tensor; BN stats stay exact because they use the f32 `y`.
    # TODO(synk): when Cout < 128, a lane-dense (block_n, H, W*Cout) out_spec
    # would avoid masked vst at the cost of an in-kernel relayout of y.
    y_ref[...] = y.reshape(nblk, H, W, Cout).astype(y_ref.dtype)

    # Per-block centered BN statistics (merged globally via Chan's formula so
    # batch statistics stay exact and robust under tiling / megacore sharding).
    blk_mean = jnp.sum(y, axis=0, keepdims=True) / M      # (1, Cout)
    d = y - blk_mean
    mean_ref[...] = blk_mean.reshape(1, 1, Cout)
    m2_ref[...] = jnp.sum(d * d, axis=0).reshape(1, 1, Cout)


# ----------------------------------------------------------------------------- wrappers


def _vmem_limit_bytes():
    """Per-generation scoped-VMEM limit (v5e/v6e: 128 MiB physical, v7x: 64 MiB)."""
    try:
        cap = pltpu.get_tpu_info().vmem_capacity_bytes
        return min(int(0.75 * cap), 100 * 1024 * 1024)
    except Exception:
        return 32 * 1024 * 1024


def _pick_block_n(N, H, W, Cin, Cout, budget_bytes):
    """Largest batch block whose per-step working set fits the VMEM budget,
    keeping >= 2 grid steps when possible so v7x megacore sharding has work."""
    def step_bytes(bn):
        hw = bn * H * W
        x_io = 2 * hw * Cin * 2            # bf16 input block, double-buffered
        y_io = 2 * hw * Cout * 2           # bf16 output block, double-buffered
        cols = hw * 3 * Cin * 2            # bf16 kw im2col
        patch = hw * 9 * Cin * 2           # bf16 9-tap patch (fused-path peak)
        acc = 2 * hw * Cout * 4            # f32 pre-BN result + centered copy
        return x_io + y_io + cols + patch + acc

    best = 1
    for d in range(1, N + 1):
        if N % d:
            continue
        if step_bytes(d) > budget_bytes:
            continue
        if N >= 2 and N // d < 2:          # keep the grid >= 2 steps (megacore)
            continue
        best = d
    # TODO(synk): for very large H*W (block_n=1 still over budget), additionally
    # tile H into row blocks with +/-1-row halo windows (manual double-buffer).
    return best


def _conv_bn_stats_pass(x_nhwc, w_k, b_k, pre_scale=None, pre_shift=None, *,
                        block_n, fuse_kh, vmem_limit):
    """One tiled conv pass: returns (pre-BN conv output [ACT_DTYPE], per-block
    means, per-block centered sums-of-squares)."""
    N, H, W, Cin = x_nhwc.shape
    Cout = b_k.shape[-1]
    assert N % block_n == 0
    nb = N // block_n
    pre = pre_scale is not None

    kernel = functools.partial(_conv3x3_bn_stats_kernel,
                               apply_pre_bn_relu=pre, fuse_kh=fuse_kh)

    in_specs = [pl.BlockSpec((block_n, H, W, Cin), lambda i: (i, 0, 0, 0))]
    args = [x_nhwc]
    if pre:
        in_specs += [pl.BlockSpec((1, Cin), lambda i: (0, 0)),
                     pl.BlockSpec((1, Cin), lambda i: (0, 0))]
        args += [pre_scale.reshape(1, Cin).astype(jnp.float32),
                 pre_shift.reshape(1, Cin).astype(jnp.float32)]
    if w_k.ndim == 2:
        w_spec = pl.BlockSpec(w_k.shape, lambda i: (0, 0))
    else:
        w_spec = pl.BlockSpec(w_k.shape, lambda i: (0, 0, 0))
    in_specs += [w_spec, pl.BlockSpec((1, Cout), lambda i: (0, 0))]
    args += [w_k, b_k]

    out_shape = (jax.ShapeDtypeStruct((N, H, W, Cout), ACT_DTYPE),
                 jax.ShapeDtypeStruct((nb, 1, Cout), jnp.float32),
                 jax.ShapeDtypeStruct((nb, 1, Cout), jnp.float32))
    out_specs = (pl.BlockSpec((block_n, H, W, Cout), lambda i: (i, 0, 0, 0)),
                 pl.BlockSpec((1, 1, Cout), lambda i: (i, 0, 0)),
                 pl.BlockSpec((1, 1, Cout), lambda i: (i, 0, 0)))

    itemsize_in = jnp.dtype(x_nhwc.dtype).itemsize
    cost = pl.CostEstimate(
        flops=int(2 * N * H * W * 9 * Cin * Cout),
        transcendentals=0,
        bytes_accessed=int(N * H * W * (Cin * itemsize_in + Cout * 2)
                           + w_k.size * 2 + b_k.size * 4 + 2 * nb * Cout * 4))

    return pl.pallas_call(
        kernel,
        grid=(nb,),
        in_specs=in_specs,
        out_specs=out_specs,
        out_shape=out_shape,
        compiler_params=pltpu.CompilerParams(
            dimension_semantics=("parallel",),          # shards over v7x's 2 TCs
            vmem_limit_bytes=vmem_limit),
        cost_estimate=cost,
    )(*args)


def _bn_scale_shift(mean_parts, m2_parts, m_blk, gamma, beta):
    """Merge per-block centered stats (Chan's formula) into a per-channel
    affine matching PyTorch training-mode BatchNorm2d (biased variance)."""
    nb = mean_parts.shape[0]
    mean_b = mean_parts.reshape(nb, -1)                     # (nb, C)
    m2_b = m2_parts.reshape(nb, -1)                         # (nb, C)
    mean = jnp.mean(mean_b, axis=0)                         # (C,)
    m2 = jnp.sum(m2_b, axis=0) + m_blk * jnp.sum((mean_b - mean[None, :]) ** 2, axis=0)
    var = m2 / (nb * m_blk)
    scale = gamma * jax.lax.rsqrt(var + EPS)
    shift = beta - mean * scale
    return scale, shift


def _pack_weights(w_oihw, fuse_kh):
    """OIHW conv weight -> MXU-ready bf16: (9*Cin, Cout) or (kh, 3*Cin, Cout)."""
    Cin = w_oihw.shape[1]
    Cout = w_oihw.shape[0]
    w = jnp.transpose(w_oihw, (2, 3, 1, 0))                 # (kh, kw, Cin, Cout)
    if fuse_kh:
        return w.reshape(9 * Cin, Cout).astype(MXU_DTYPE)
    return w.reshape(3, 3 * Cin, Cout).astype(MXU_DTYPE)


def conv_block_x2(x_nchw, params):
    """Forward pass of ConvBlockx2.  x_nchw: (N, Cin, H, W) -> (N, Cout, H, W)."""
    w1, b1, g1, bt1, w2, b2, g2, bt2 = params
    N, Cin, H, W = x_nchw.shape
    Cout = w1.shape[0]

    vmem_limit = _vmem_limit_bytes()
    budget = vmem_limit // 2

    # NCHW -> NHWC + f32 -> bf16 once at the module boundary (XLA fuses the cast
    # into the transpose copy; keep NHWC end-to-end in a real network and this
    # pass disappears from the hot path entirely).
    x = jnp.transpose(x_nchw, (0, 2, 3, 1)).astype(MXU_DTYPE)

    fuse1 = (9 * Cin) <= FUSE_K_MAX
    fuse2 = (9 * Cout) <= FUSE_K_MAX
    w1k = _pack_weights(w1, fuse1)
    w2k = _pack_weights(w2, fuse2)
    b1k = b1.reshape(1, Cout).astype(jnp.float32)
    b2k = b2.reshape(1, Cout).astype(jnp.float32)

    bn1 = _pick_block_n(N, H, W, Cin, Cout, budget)
    bn2 = _pick_block_n(N, H, W, Cout, Cout, budget)

    # conv1 (+ per-block centered BN1 stats), tiled grid over batch blocks.
    y1, mean1, m2_1 = _conv_bn_stats_pass(x, w1k, b1k, block_n=bn1,
                                          fuse_kh=fuse1, vmem_limit=vmem_limit)
    sc1, sh1 = _bn_scale_shift(mean1, m2_1, bn1 * H * W, g1, bt1)

    # BN1+ReLU fused into conv2's input path; conv2 (+ per-block BN2 stats).
    y2, mean2, m2_2 = _conv_bn_stats_pass(y1, w2k, b2k, pre_scale=sc1,
                                          pre_shift=sh1, block_n=bn2,
                                          fuse_kh=fuse2, vmem_limit=vmem_limit)
    sc2, sh2 = _bn_scale_shift(mean2, m2_2, bn2 * H * W, g2, bt2)

    # BN2 + ReLU epilogue: XLA fuses this elementwise with the mandatory
    # NHWC -> NCHW boundary transpose into a single HBM pass.
    out = jnp.maximum(y2.astype(jnp.float32) * sc2[None, None, None, :]
                      + sh2[None, None, None, :], 0.0)
    return jnp.transpose(out, (0, 3, 1, 2))


# ----------------------------------------------------------------------------- reference / test


def ref_forward(x, w1, b1, g1, bt1, w2, b2, g2, bt2):
    """Pure-JAX f32 reference matching PyTorch training-mode forward."""
    def conv(x, w, b):
        y = jax.lax.conv_general_dilated(
            x, w, window_strides=(1, 1), padding="SAME",
            dimension_numbers=("NCHW", "OIHW", "NCHW"))
        return y + b[None, :, None, None]

    def bn(x, g, bt):
        m = jnp.mean(x, axis=(0, 2, 3), keepdims=True)
        v = jnp.mean((x - m) ** 2, axis=(0, 2, 3), keepdims=True)
        return (x - m) / jnp.sqrt(v + EPS) * g[None, :, None, None] + bt[None, :, None, None]

    y = jnp.maximum(bn(conv(x, w1, b1), g1, bt1), 0.0)
    y = jnp.maximum(bn(conv(y, w2, b2), g2, bt2), 0.0)
    return y


if __name__ == "__main__":
    N, Cin, Cout, H, W = 2, 4, 8, 16, 16
    key = jax.random.PRNGKey(0)
    ks = jax.random.split(key, 9)

    x = jax.random.normal(ks[0], (N, Cin, H, W), jnp.float32)
    # deterministic synthetic parameters (shapes from nn.Conv2d / nn.BatchNorm2d)
    w1 = 0.2 * jax.random.normal(ks[1], (Cout, Cin, 3, 3), jnp.float32)
    b1 = 0.1 * jax.random.normal(ks[2], (Cout,), jnp.float32)
    g1 = 1.0 + 0.1 * jax.random.normal(ks[3], (Cout,), jnp.float32)
    bt1 = 0.1 * jax.random.normal(ks[4], (Cout,), jnp.float32)
    w2 = 0.2 * jax.random.normal(ks[5], (Cout, Cout, 3, 3), jnp.float32)
    b2 = 0.1 * jax.random.normal(ks[6], (Cout,), jnp.float32)
    g2 = 1.0 + 0.1 * jax.random.normal(ks[7], (Cout,), jnp.float32)
    bt2 = 0.1 * jax.random.normal(ks[8], (Cout,), jnp.float32)
    params = (w1, b1, g1, bt1, w2, b2, g2, bt2)

    fwd = jax.jit(conv_block_x2)
    out = jax.block_until_ready(fwd(x, params))
    ref = jax.block_until_ready(ref_forward(x, *params))

    err = float(jnp.max(jnp.abs(out - ref)))
    # bf16 MXU operands + bf16 HBM activations vs the all-f32 reference give a
    # few e-2 max abs error at these magnitudes; 1e-1 leaves comfortable margin.
    if not (err < 1e-1):
        raise AssertionError(f"Pallas kernel mismatch vs reference, max abs err={err}")
    print("KERNEL_OK")
</pallas_src>

<mosaic_0001>
module attributes {stable_mosaic.version = 11 : i64} {
  func.func @_conv3x3_bn_stats_kernel(%arg0: i32, %arg1: memref<1x16x16x4xbf16, #tpu.memory_space<vmem>>, %arg2: memref<36x8xbf16, #tpu.memory_space<vmem>>, %arg3: memref<1x8xf32, #tpu.memory_space<vmem>>, %arg4: memref<1x16x16x8xbf16, #tpu.memory_space<vmem>>, %arg5: memref<1x1x8xf32, #tpu.memory_space<vmem>>, %arg6: memref<1x1x8xf32, #tpu.memory_space<vmem>>) attributes {dimension_semantics = [#tpu.dimension_semantics<parallel>], iteration_bounds = array<i64: 2>, scalar_prefetch = 0 : i64, scratch_operands = 0 : i64, tpu.core_type = #tpu.core_type<tc>, window_params = [{transform_indices = @transform_0, window_bounds = array<i64: 1, 16, 16, 4>}, {pipeline_mode = #tpu.pipeline_mode<synchronous>, transform_indices = @transform_1, window_bounds = array<i64: 36, 8>}, {pipeline_mode = #tpu.pipeline_mode<synchronous>, transform_indices = @transform_2, window_bounds = array<i64: 1, 8>}, {transform_indices = @transform_3, window_bounds = array<i64: 1, 16, 16, 8>}, {transform_indices = @transform_4, window_bounds = array<i64: 1, 1, 8>}, {transform_indices = @transform_5, window_bounds = array<i64: 1, 1, 8>}]} {
    %c0 = arith.constant 0 : index
    %c0_0 = arith.constant 0 : index
    %c0_1 = arith.constant 0 : index
    %c0_2 = arith.constant 0 : index
    %0 = vector.load %arg1[%c0, %c0_0, %c0_1, %c0_2] : memref<1x16x16x4xbf16, #tpu.memory_space<vmem>>, vector<1x16x16x4xbf16>
    %cst = arith.constant 0.000000e+00 : bf16
    %1 = vector.broadcast %cst : bf16 to vector<1x16x1x4xbf16>
    %2 = vector.extract_strided_slice %0 {offsets = [0, 0, 0, 0], sizes = [1, 16, 15, 4], strides = [1, 1, 1, 1]} : vector<1x16x16x4xbf16> to vector<1x16x15x4xbf16>
    %3 = tpu.concatenate %1, %2 in 2 : vector<1x16x1x4xbf16>, vector<1x16x15x4xbf16> -> vector<1x16x16x4xbf16>
    %4 = vector.extract_strided_slice %0 {offsets = [0, 0, 1, 0], sizes = [1, 16, 15, 4], strides = [1, 1, 1, 1]} : vector<1x16x16x4xbf16> to vector<1x16x15x4xbf16>
    %5 = tpu.concatenate %4, %1 in 2 : vector<1x16x15x4xbf16>, vector<1x16x1x4xbf16> -> vector<1x16x16x4xbf16>
    %6 = tpu.concatenate %3, %0, %5 in 3 : vector<1x16x16x4xbf16>, vector<1x16x16x4xbf16>, vector<1x16x16x4xbf16> -> vector<1x16x16x12xbf16>
    %cst_3 = arith.constant 0.000000e+00 : bf16
    %7 = vector.broadcast %cst_3 : bf16 to vector<1x1x16x12xbf16>
    %8 = vector.extract_strided_slice %6 {offsets = [0, 0, 0, 0], sizes = [1, 15, 16, 12], strides = [1, 1, 1, 1]} : vector<1x16x16x12xbf16> to vector<1x15x16x12xbf16>
    %9 = tpu.concatenate %7, %8 in 1 : vector<1x1x16x12xbf16>, vector<1x15x16x12xbf16> -> vector<1x16x16x12xbf16>
    %10 = vector.extract_strided_slice %6 {offsets = [0, 1, 0, 0], sizes = [1, 15, 16, 12], strides = [1, 1, 1, 1]} : vector<1x16x16x12xbf16> to vector<1x15x16x12xbf16>
    %11 = tpu.concatenate %10, %7 in 1 : vector<1x15x16x12xbf16>, vector<1x1x16x12xbf16> -> vector<1x16x16x12xbf16>
    %12 = tpu.concatenate %9, %6, %11 in 3 : vector<1x16x16x12xbf16>, vector<1x16x16x12xbf16>, vector<1x16x16x12xbf16> -> vector<1x16x16x36xbf16>
    %13 = vector.shape_cast %12 : vector<1x16x16x36xbf16> to vector<256x36xbf16>
    %c0_4 = arith.constant 0 : index
    %c0_5 = arith.constant 0 : index
    %14 = vector.load %arg2[%c0_4, %c0_5] : memref<36x8xbf16, #tpu.memory_space<vmem>>, vector<36x8xbf16>
    %cst_6 = arith.constant dense<0.000000e+00> : vector<256x8xf32>
    %15 = tpu.matmul %13, %14, %cst_6 {dimension_numbers = #tpu.dot_dimension_numbers<[1], [0], [0], [1], [0, 0, 1, 1], [], []>} : vector<256x36xbf16>, vector<36x8xbf16>, vector<256x8xf32> -> vector<256x8xf32>
    %c0_7 = arith.constant 0 : index
    %c0_8 = arith.constant 0 : index
    %16 = vector.load %arg3[%c0_7, %c0_8] : memref<1x8xf32, #tpu.memory_space<vmem>>, vector<1x8xf32>
    %17 = vector.broadcast %16 : vector<1x8xf32> to vector<256x8xf32>
    %18 = arith.addf %15, %17 : vector<256x8xf32>
    %19 = vector.shape_cast %18 : vector<256x8xf32> to vector<1x16x16x8xf32>
    %20 = arith.truncf %19 : vector<1x16x16x8xf32> to vector<1x16x16x8xbf16>
    %c0_9 = arith.constant 0 : index
    %c0_10 = arith.constant 0 : index
    %c0_11 = arith.constant 0 : index
    %c0_12 = arith.constant 0 : index
    %21 = vector.load %arg4[%c0_9, %c0_10, %c0_11, %c0_12] : memref<1x16x16x8xbf16, #tpu.memory_space<vmem>>, vector<1x16x16x8xbf16>
    tpu.vector_store %arg4[%c0_9, %c0_10, %c0_11, %c0_12], %20 {strides = array<i32>} : memref<1x16x16x8xbf16, #tpu.memory_space<vmem>>, vector<1x16x16x8xbf16>,
    %cst_13 = arith.constant dense<0.000000e+00> : vector<8xf32>
    %22 = vector.multi_reduction <add>, %18, %cst_13 [0] : vector<256x8xf32> to vector<8xf32>
    %23 = vector.shape_cast %22 : vector<8xf32> to vector<1x8xf32>
    %cst_14 = arith.constant 2.560000e+02 : f32
    %24 = vector.broadcast %cst_14 : f32 to vector<1x8xf32>
    %25 = arith.divf %23, %24 : vector<1x8xf32>
    %26 = vector.broadcast %25 : vector<1x8xf32> to vector<256x8xf32>
    %27 = arith.subf %18, %26 : vector<256x8xf32>
    %28 = vector.shape_cast %25 : vector<1x8xf32> to vector<1x1x8xf32>
    %c0_15 = arith.constant 0 : index
    %c0_16 = arith.constant 0 : index
    %c0_17 = arith.constant 0 : index
    %29 = vector.load %arg5[%c0_15, %c0_16, %c0_17] : memref<1x1x8xf32, #tpu.memory_space<vmem>>, vector<1x1x8xf32>
    tpu.vector_store %arg5[%c0_15, %c0_16, %c0_17], %28 {strides = array<i32>} : memref<1x1x8xf32, #tpu.memory_space<vmem>>, vector<1x1x8xf32>,
    %30 = arith.mulf %27, %27 : vector<256x8xf32>
    %cst_18 = arith.constant dense<0.000000e+00> : vector<8xf32>
    %31 = vector.multi_reduction <add>, %30, %cst_18 [0] : vector<256x8xf32> to vector<8xf32>
    %32 = vector.shape_cast %31 : vector<8xf32> to vector<1x1x8xf32>
    %c0_19 = arith.constant 0 : index
    %c0_20 = arith.constant 0 : index
    %c0_21 = arith.constant 0 : index
    %33 = vector.load %arg6[%c0_19, %c0_20, %c0_21] : memref<1x1x8xf32, #tpu.memory_space<vmem>>, vector<1x1x8xf32>
    tpu.vector_store %arg6[%c0_19, %c0_20, %c0_21], %32 {strides = array<i32>} : memref<1x1x8xf32, #tpu.memory_space<vmem>>, vector<1x1x8xf32>,
    return
  }
  func.func @transform_0(%arg0: i32) -> (i32, i32, i32, i32) {
    %c0_i32 = arith.constant 0 : i32
    %c0_i32_0 = arith.constant 0 : i32
    %c0_i32_1 = arith.constant 0 : i32
    %c0_i32_2 = arith.constant 0 : i32
    return %arg0, %c0_i32, %c0_i32_0, %c0_i32_1 : i32, i32, i32, i32
  }
  func.func @transform_1(%arg0: i32) -> (i32, i32) {
    %c0_i32 = arith.constant 0 : i32
    %c0_i32_0 = arith.constant 0 : i32
    %c0_i32_1 = arith.constant 0 : i32
    return %c0_i32, %c0_i32_0 : i32, i32
  }
  func.func @transform_2(%arg0: i32) -> (i32, i32) {
    %c0_i32 = arith.constant 0 : i32
    %c0_i32_0 = arith.constant 0 : i32
    %c0_i32_1 = arith.constant 0 : i32
    return %c0_i32, %c0_i32_0 : i32, i32
  }
  func.func @transform_3(%arg0: i32) -> (i32, i32, i32, i32) {
    %c0_i32 = arith.constant 0 : i32
    %c0_i32_0 = arith.constant 0 : i32
    %c0_i32_1 = arith.constant 0 : i32
    %c0_i32_2 = arith.constant 0 : i32
    return %arg0, %c0_i32, %c0_i32_0, %c0_i32_1 : i32, i32, i32, i32
  }
  func.func @transform_4(%arg0: i32) -> (i32, i32, i32) {
    %c0_i32 = arith.constant 0 : i32
    %c0_i32_0 = arith.constant 0 : i32
    %c0_i32_1 = arith.constant 0 : i32
    return %arg0, %c0_i32, %c0_i32_0 : i32, i32, i32
  }
  func.func @transform_5(%arg0: i32) -> (i32, i32, i32) {
    %c0_i32 = arith.constant 0 : i32
    %c0_i32_0 = arith.constant 0 : i32
    %c0_i32_1 = arith.constant 0 : i32
    return %arg0, %c0_i32, %c0_i32_0 : i32, i32, i32
  }
}

module attributes {stable_mosaic.version = 11 : i64} {
  func.func @_conv3x3_bn_stats_kernel(%arg0: i32, %arg1: memref<1x16x16x8xbf16, #tpu.memory_space<vmem>>, %arg2: memref<1x8xf32, #tpu.memory_space<vmem>>, %arg3: memref<1x8xf32, #tpu.memory_space<vmem>>, %arg4: memref<72x8xbf16, #tpu.memory_space<vmem>>, %arg5: memref<1x8xf32, #tpu.memory_space<vmem>>, %arg6: memref<1x16x16x8xbf16, #tpu.memory_space<vmem>>, %arg7: memref<1x1x8xf32, #tpu.memory_space<vmem>>, %arg8: memref<1x1x8xf32, #tpu.memory_space<vmem>>) attributes {dimension_semantics = [#tpu.dimension_semantics<parallel>], iteration_bounds = array<i64: 2>, scalar_prefetch = 0 : i64, scratch_operands = 0 : i64, tpu.core_type = #tpu.core_type<tc>, window_params = [{transform_indices = @transform_0, window_bounds = array<i64: 1, 16, 16, 8>}, {pipeline_mode = #tpu.pipeline_mode<synchronous>, transform_indices = @transform_1, window_bounds = array<i64: 1, 8>}, {pipeline_mode = #tpu.pipeline_mode<synchronous>, transform_indices = @transform_2, window_bounds = array<i64: 1, 8>}, {pipeline_mode = #tpu.pipeline_mode<synchronous>, transform_indices = @transform_3, window_bounds = array<i64: 72, 8>}, {pipeline_mode = #tpu.pipeline_mode<synchronous>, transform_indices = @transform_4, window_bounds = array<i64: 1, 8>}, {transform_indices = @transform_5, window_bounds = array<i64: 1, 16, 16, 8>}, {transform_indices = @transform_6, window_bounds = array<i64: 1, 1, 8>}, {transform_indices = @transform_7, window_bounds = array<i64: 1, 1, 8>}]} {
    %c0 = arith.constant 0 : index
    %c0_0 = arith.constant 0 : index
    %c0_1 = arith.constant 0 : index
    %c0_2 = arith.constant 0 : index
    %0 = vector.load %arg1[%c0, %c0_0, %c0_1, %c0_2] : memref<1x16x16x8xbf16, #tpu.memory_space<vmem>>, vector<1x16x16x8xbf16>
    %c0_3 = arith.constant 0 : index
    %c0_4 = arith.constant 0 : index
    %1 = vector.load %arg2[%c0_3, %c0_4] : memref<1x8xf32, #tpu.memory_space<vmem>>, vector<1x8xf32>
    %2 = vector.shape_cast %1 : vector<1x8xf32> to vector<1x1x1x8xf32>
    %c0_5 = arith.constant 0 : index
    %c0_6 = arith.constant 0 : index
    %3 = vector.load %arg3[%c0_5, %c0_6] : memref<1x8xf32, #tpu.memory_space<vmem>>, vector<1x8xf32>
    %4 = vector.shape_cast %3 : vector<1x8xf32> to vector<1x1x1x8xf32>
    %5 = arith.extf %0 : vector<1x16x16x8xbf16> to vector<1x16x16x8xf32>
    %6 = vector.broadcast %2 : vector<1x1x1x8xf32> to vector<1x16x16x8xf32>
    %7 = arith.mulf %5, %6 : vector<1x16x16x8xf32>
    %8 = vector.broadcast %4 : vector<1x1x1x8xf32> to vector<1x16x16x8xf32>
    %9 = arith.addf %7, %8 : vector<1x16x16x8xf32>
    %cst = arith.constant 0.000000e+00 : f32
    %10 = vector.broadcast %cst : f32 to vector<1x16x16x8xf32>
    %11 = arith.maximumf %9, %10 : vector<1x16x16x8xf32>
    %12 = arith.truncf %11 : vector<1x16x16x8xf32> to vector<1x16x16x8xbf16>
    %cst_7 = arith.constant 0.000000e+00 : bf16
    %13 = vector.broadcast %cst_7 : bf16 to vector<1x16x1x8xbf16>
    %14 = vector.extract_strided_slice %12 {offsets = [0, 0, 0, 0], sizes = [1, 16, 15, 8], strides = [1, 1, 1, 1]} : vector<1x16x16x8xbf16> to vector<1x16x15x8xbf16>
    %15 = tpu.concatenate %13, %14 in 2 : vector<1x16x1x8xbf16>, vector<1x16x15x8xbf16> -> vector<1x16x16x8xbf16>
    %16 = vector.extract_strided_slice %12 {offsets = [0, 0, 1, 0], sizes = [1, 16, 15, 8], strides = [1, 1, 1, 1]} : vector<1x16x16x8xbf16> to vector<1x16x15x8xbf16>
    %17 = tpu.concatenate %16, %13 in 2 : vector<1x16x15x8xbf16>, vector<1x16x1x8xbf16> -> vector<1x16x16x8xbf16>
    %18 = tpu.concatenate %15, %12, %17 in 3 : vector<1x16x16x8xbf16>, vector<1x16x16x8xbf16>, vector<1x16x16x8xbf16> -> vector<1x16x16x24xbf16>
    %cst_8 = arith.constant 0.000000e+00 : bf16
    %19 = vector.broadcast %cst_8 : bf16 to vector<1x1x16x24xbf16>
    %20 = vector.extract_strided_slice %18 {offsets = [0, 0, 0, 0], sizes = [1, 15, 16, 24], strides = [1, 1, 1, 1]} : vector<1x16x16x24xbf16> to vector<1x15x16x24xbf16>
    %21 = tpu.concatenate %19, %20 in 1 : vector<1x1x16x24xbf16>, vector<1x15x16x24xbf16> -> vector<1x16x16x24xbf16>
    %22 = vector.extract_strided_slice %18 {offsets = [0, 1, 0, 0], sizes = [1, 15, 16, 24], strides = [1, 1, 1, 1]} : vector<1x16x16x24xbf16> to vector<1x15x16x24xbf16>
    %23 = tpu.concatenate %22, %19 in 1 : vector<1x15x16x24xbf16>, vector<1x1x16x24xbf16> -> vector<1x16x16x24xbf16>
    %24 = tpu.concatenate %21, %18, %23 in 3 : vector<1x16x16x24xbf16>, vector<1x16x16x24xbf16>, vector<1x16x16x24xbf16> -> vector<1x16x16x72xbf16>
    %25 = vector.shape_cast %24 : vector<1x16x16x72xbf16> to vector<256x72xbf16>
    %c0_9 = arith.constant 0 : index
    %c0_10 = arith.constant 0 : index
    %26 = vector.load %arg4[%c0_9, %c0_10] : memref<72x8xbf16, #tpu.memory_space<vmem>>, vector<72x8xbf16>
    %cst_11 = arith.constant dense<0.000000e+00> : vector<256x8xf32>
    %27 = tpu.matmul %25, %26, %cst_11 {dimension_numbers = #tpu.dot_dimension_numbers<[1], [0], [0], [1], [0, 0, 1, 1], [], []>} : vector<256x72xbf16>, vector<72x8xbf16>, vector<256x8xf32> -> vector<256x8xf32>
    %c0_12 = arith.constant 0 : index
    %c0_13 = arith.constant 0 : index
    %28 = vector.load %arg5[%c0_12, %c0_13] : memref<1x8xf32, #tpu.memory_space<vmem>>, vector<1x8xf32>
    %29 = vector.broadcast %28 : vector<1x8xf32> to vector<256x8xf32>
    %30 = arith.addf %27, %29 : vector<256x8xf32>
    %31 = vector.shape_cast %30 : vector<256x8xf32> to vector<1x16x16x8xf32>
    %32 = arith.truncf %31 : vector<1x16x16x8xf32> to vector<1x16x16x8xbf16>
    %c0_14 = arith.constant 0 : index
    %c0_15 = arith.constant 0 : index
    %c0_16 = arith.constant 0 : index
    %c0_17 = arith.constant 0 : index
    %33 = vector.load %arg6[%c0_14, %c0_15, %c0_16, %c0_17] : memref<1x16x16x8xbf16, #tpu.memory_space<vmem>>, vector<1x16x16x8xbf16>
    tpu.vector_store %arg6[%c0_14, %c0_15, %c0_16, %c0_17], %32 {strides = array<i32>} : memref<1x16x16x8xbf16, #tpu.memory_space<vmem>>, vector<1x16x16x8xbf16>,
    %cst_18 = arith.constant dense<0.000000e+00> : vector<8xf32>
    %34 = vector.multi_reduction <add>, %30, %cst_18 [0] : vector<256x8xf32> to vector<8xf32>
    %35 = vector.shape_cast %34 : vector<8xf32> to vector<1x8xf32>
    %cst_19 = arith.constant 2.560000e+02 : f32
    %36 = vector.broadcast %cst_19 : f32 to vector<1x8xf32>
    %37 = arith.divf %35, %36 : vector<1x8xf32>
    %38 = vector.broadcast %37 : vector<1x8xf32> to vector<256x8xf32>
    %39 = arith.subf %30, %38 : vector<256x8xf32>
    %40 = vector.shape_cast %37 : vector<1x8xf32> to vector<1x1x8xf32>
    %c0_20 = arith.constant 0 : index
    %c0_21 = arith.constant 0 : index
    %c0_22 = arith.constant 0 : index
    %41 = vector.load %arg7[%c0_20, %c0_21, %c0_22] : memref<1x1x8xf32, #tpu.memory_space<vmem>>, vector<1x1x8xf32>
    tpu.vector_store %arg7[%c0_20, %c0_21, %c0_22], %40 {strides = array<i32>} : memref<1x1x8xf32, #tpu.memory_space<vmem>>, vector<1x1x8xf32>,
    %42 = arith.mulf %39, %39 : vector<256x8xf32>
    %cst_23 = arith.constant dense<0.000000e+00> : vector<8xf32>
    %43 = vector.multi_reduction <add>, %42, %cst_23 [0] : vector<256x8xf32> to vector<8xf32>
    %44 = vector.shape_cast %43 : vector<8xf32> to vector<1x1x8xf32>
    %c0_24 = arith.constant 0 : index
    %c0_25 = arith.constant 0 : index
    %c0_26 = arith.constant 0 : index
    %45 = vector.load %arg8[%c0_24, %c0_25, %c0_26] : memref<1x1x8xf32, #tpu.memory_space<vmem>>, vector<1x1x8xf32>
    tpu.vector_store %arg8[%c0_24, %c0_25, %c0_26], %44 {strides = array<i32>} : memref<1x1x8xf32, #tpu.memory_space<vmem>>, vector<1x1x8xf32>,
    return
  }
  func.func @transform_0(%arg0: i32) -> (i32, i32, i32, i32) {
    %c0_i32 = arith.constant 0 : i32
    %c0_i32_0 = arith.constant 0 : i32
    %c0_i32_1 = arith.constant 0 : i32
    %c0_i32_2 = arith.constant 0 : i32
    return %arg0, %c0_i32, %c0_i32_0, %c0_i32_1 : i32, i32, i32, i32
  }
  func.func @transform_1(%arg0: i32) -> (i32, i32) {
    %c0_i32 = arith.constant 0 : i32
    %c0_i32_0 = arith.constant 0 : i32
    %c0_i32_1 = arith.constant 0 : i32
    return %c0_i32, %c0_i32_0 : i32, i32
  }
  func.func @transform_2(%arg0: i32) -> (i32, i32) {
    %c0_i32 = arith.constant 0 : i32
    %c0_i32_0 = arith.constant 0 : i32
    %c0_i32_1 = arith.constant 0 : i32
    return %c0_i32, %c0_i32_0 : i32, i32
  }
  func.func @transform_3(%arg0: i32) -> (i32, i32) {
    %c0_i32 = arith.constant 0 : i32
    %c0_i32_0 = arith.constant 0 : i32
    %c0_i32_1 = arith.constant 0 : i32
    return %c0_i32, %c0_i32_0 : i32, i32
  }
  func.func @transform_4(%arg0: i32) -> (i32, i32) {
    %c0_i32 = arith.constant 0 : i32
    %c0_i32_0 = arith.constant 0 : i32
    %c0_i32_1 = arith.constant 0 : i32
    return %c0_i32, %c0_i32_0 : i32, i32
  }
  func.func @transform_5(%arg0: i32) -> (i32, i32, i32, i32) {
    %c0_i32 = arith.constant 0 : i32
    %c0_i32_0 = arith.constant 0 : i32
    %c0_i32_1 = arith.constant 0 : i32
    %c0_i32_2 = arith.constant 0 : i32
    return %arg0, %c0_i32, %c0_i32_0, %c0_i32_1 : i32, i32, i32, i32
  }
  func.func @transform_6(%arg0: i32) -> (i32, i32, i32) {
    %c0_i32 = arith.constant 0 : i32
    %c0_i32_0 = arith.constant 0 : i32
    %c0_i32_1 = arith.constant 0 : i32
    return %arg0, %c0_i32, %c0_i32_0 : i32, i32, i32
  }
  func.func @transform_7(%arg0: i32) -> (i32, i32, i32) {
    %c0_i32 = arith.constant 0 : i32
    %c0_i32_0 = arith.constant 0 : i32
    %c0_i32_1 = arith.constant 0 : i32
    return %arg0, %c0_i32, %c0_i32_0 : i32, i32, i32
  }
}

</mosaic_0001>

<llo_original>
// kernel: conv_block_x2.2
$region0: #{conv_block_x2.2}
  #allocation0 [shape = 'u32[]', space=smem, size = 0x4, offset = 0x4, fixed_abs, tag = 'smem constant byte address 0x4 - core index']
  #allocation1 [shape = 'u32[72,128]{1,0:T(1,128)}', space=vmem, size = 0x9000, scoped, tag = 'internal scratch']
  %s0 = inlined_call_operand.vmem [shape: bf16[2,16,16,4], index: 0, kind: input, shape index: {}]
  %s1 = inlined_call_operand.vmem [shape: bf16[36,8], index: 1, kind: input, shape index: {}]
  %s2 = inlined_call_operand.vmem [shape: f32[1,8], index: 2, kind: input, shape index: {}]
  %s3 = inlined_call_operand.vmem [shape: bf16[2,16,16,8], index: 3, kind: output, shape index: {0}]
  %s4 = inlined_call_operand.vmem [shape: f32[2,1,8], index: 4, kind: output, shape index: {1}]
  %s5 = inlined_call_operand.vmem [shape: f32[2,1,8], index: 5, kind: output, shape index: {2}]
  %6 = xla_tuple %s3, %s4, %s5
  %s7 = sld [smem:[#allocation0]]
  $region61: #{conv_block_x2.2} parent=0
    _
  %s9 = ssub.s32 1, %s7
  %s10 = scalar_select 0, %s9, %s7
  loop: start=0, step=1, limit=4
  $region2: #{conv_block_x2.2} parent=0 // loop_pre_header
    _
  $region3: #{conv_block_x2.2} parent=0 // loop_header
    %s12 = sphi 0, %s16
    %p13 = scmp.ge.s32.totalorder %s12, 4
    %s22 = sphi 0, %s24
    %s25 = sphi 0, %s22
    %s26 = sphi 0, %s25
    %s42 = sphi 0, %s26
    %s46 = sphi 0, %s46
    %s48 = sphi 0, %s46
    %s49 = sphi 0, %s48
    %s63 = sphi 0, %s49
    %s67 = sphi 0, %s67
    %s69 = sphi 0, %s67
    %s70 = sphi 0, %s69
    %s84 = sphi 0, %s70
    %s90 = sphi 0, %s92
    %s93 = sphi 0, %s90
    %s94 = sphi 0, %s93
    %s110 = sphi 0, %s94
    %s116 = sphi 0, %s118
    %s119 = sphi 0, %s116
    %s120 = sphi 0, %s119
    %s136 = sphi 0, %s120
    %s142 = sphi 0, %s144
    %s145 = sphi 0, %s142
    %s146 = sphi 0, %s145
    %s162 = sphi 0, %s146
  $region4: #{conv_block_x2.2} parent=0 // loop_header_branch
    %15 = sbr.rel (%p13) target = $region8
  $region5: #{conv_block_x2.2} parent=0 // loop_body
    %s17 = ssub.s32 %s12, 1
    %s18 = ssub.s32 %s12, 2
    %s19 = sadd.s32 %s12, 1
    %s20 = ssub.s32 %s12, %s19
    %p21 = scmp.eq.s32.totalorder %s20, 0
    %s23 = sadd.s32 %s22, 1
    %s24 = scalar_select %p21, %s22, %s23
    %p27 = pneg %p21
    %p28 = scmp.eq.s32.totalorder %s12, 1
    %p29 = por %p27, %p28
    %p30 = scmp.ne.s32.totalorder %s22, %s25
    %p31 = scmp.eq.s32.totalorder %s12, 0
    %p32 = por %p30, %p31
    %p33 = scmp.ne.s32.totalorder %s22, %s25
    %p34 = scmp.eq.s32.totalorder %s17, 1
    %p35 = por %p33, %p34
    %p36 = scmp.ne.s32.totalorder %s25, %s26
    %p37 = scmp.eq.s32.totalorder %s17, 0
    %p38 = por %p36, %p37
    %p39 = scmp.ne.s32.totalorder %s25, %s26
    %p40 = scmp.eq.s32.totalorder %s18, 1
    %p41 = por %p39, %p40
    %p43 = scmp.ne.s32.totalorder %s26, %s42
    %p44 = scmp.eq.s32.totalorder %s18, 0
    %p45 = por %p43, %p44
    %s47 = sadd.s32 %s46, 1
    %p50 = scmp.eq.s32.totalorder %s12, 1
    %p51 = scmp.ne.s32.totalorder %s46, %s48
    %p52 = scmp.eq.s32.totalorder %s12, 0
    %p53 = por %p51, %p52
    %p54 = scmp.ne.s32.totalorder %s46, %s48
    %p55 = scmp.eq.s32.totalorder %s17, 1
    %p56 = por %p54, %p55
    %p57 = scmp.ne.s32.totalorder %s48, %s49
    %p58 = scmp.eq.s32.totalorder %s17, 0
    %p59 = por %p57, %p58
    %p60 = scmp.ne.s32.totalorder %s48, %s49
    %p61 = scmp.eq.s32.totalorder %s18, 1
    %p62 = por %p60, %p61
    %p64 = scmp.ne.s32.totalorder %s49, %s63
    %p65 = scmp.eq.s32.totalorder %s18, 0
    %p66 = por %p64, %p65
    %s68 = sadd.s32 %s67, 1
    %p71 = scmp.eq.s32.totalorder %s12, 1
    %p72 = scmp.ne.s32.totalorder %s67, %s69
    %p73 = scmp.eq.s32.totalorder %s12, 0
    %p74 = por %p72, %p73
    %p75 = scmp.ne.s32.totalorder %s67, %s69
    %p76 = scmp.eq.s32.totalorder %s17, 1
    %p77 = por %p75, %p76
    %p78 = scmp.ne.s32.totalorder %s69, %s70
    %p79 = scmp.eq.s32.totalorder %s17, 0
    %p80 = por %p78, %p79
    %p81 = scmp.ne.s32.totalorder %s69, %s70
    %p82 = scmp.eq.s32.totalorder %s18, 1
    %p83 = por %p81, %p82
    %p85 = scmp.ne.s32.totalorder %s70, %s84
    %p86 = scmp.eq.s32.totalorder %s18, 0
    %p87 = por %p85, %p86
    %s88 = ssub.s32 %s12, %s19
    %p89 = scmp.eq.s32.totalorder %s88, 0
    %s91 = sadd.s32 %s90, 1
    %s92 = scalar_select %p89, %s90, %s91
    %p95 = pneg %p89
    %p96 = scmp.eq.s32.totalorder %s12, 1
    %p97 = por %p95, %p96
    %p98 = scmp.ne.s32.totalorder %s90, %s93
    %p99 = scmp.eq.s32.totalorder %s12, 0
    %p100 = por %p98, %p99
    %p101 = scmp.ne.s32.totalorder %s90, %s93
    %p102 = scmp.eq.s32.totalorder %s17, 1
    %p103 = por %p101, %p102
    %p104 = scmp.ne.s32.totalorder %s93, %s94
    %p105 = scmp.eq.s32.totalorder %s17, 0
    %p106 = por %p104, %p105
    %p107 = scmp.ne.s32.totalorder %s93, %s94
    %p108 = scmp.eq.s32.totalorder %s18, 1
    %p109 = por %p107, %p108
    %p111 = scmp.ne.s32.totalorder %s94, %s110
    %p112 = scmp.eq.s32.totalorder %s18, 0
    %p113 = por %p111, %p112
    %s114 = ssub.s32 %s12, %s19
    %p115 = scmp.eq.s32.totalorder %s114, 0
    %s117 = sadd.s32 %s116, 1
    %s118 = scalar_select %p115, %s116, %s117
    %p121 = pneg %p115
    %p122 = scmp.eq.s32.totalorder %s12, 1
    %p123 = por %p121, %p122
    %p124 = scmp.ne.s32.totalorder %s116, %s119
    %p125 = scmp.eq.s32.totalorder %s12, 0
    %p126 = por %p124, %p125
    %p127 = scmp.ne.s32.totalorder %s116, %s119
    %p128 = scmp.eq.s32.totalorder %s17, 1
    %p129 = por %p127, %p128
    %p130 = scmp.ne.s32.totalorder %s119, %s120
    %p131 = scmp.eq.s32.totalorder %s17, 0
    %p132 = por %p130, %p131
    %p133 = scmp.ne.s32.totalorder %s119, %s120
    %p134 = scmp.eq.s32.totalorder %s18, 1
    %p135 = por %p133, %p134
    %p137 = scmp.ne.s32.totalorder %s120, %s136
    %p138 = scmp.eq.s32.totalorder %s18, 0
    %p139 = por %p137, %p138
    %s140 = ssub.s32 %s12, %s19
    %p141 = scmp.eq.s32.totalorder %s140, 0
    %s143 = sadd.s32 %s142, 1
    %s144 = scalar_select %p141, %s142, %s143
    %p147 = pneg %p141
    %p148 = scmp.eq.s32.totalorder %s12, 1
    %p149 = por %p147, %p148
    %p150 = scmp.ne.s32.totalorder %s142, %s145
    %p151 = scmp.eq.s32.totalorder %s12, 0
    %p152 = por %p150, %p151
    %p153 = scmp.ne.s32.totalorder %s142, %s145
    %p154 = scmp.eq.s32.totalorder %s17, 1
    %p155 = por %p153, %p154
    %p156 = scmp.ne.s32.totalorder %s145, %s146
    %p157 = scmp.eq.s32.totalorder %s17, 0
    %p158 = por %p156, %p157
    %p159 = scmp.ne.s32.totalorder %s145, %s146
    %p160 = scmp.eq.s32.totalorder %s18, 1
    %p161 = por %p159, %p160
    %p163 = scmp.ne.s32.totalorder %s146, %s162
    %p164 = scmp.eq.s32.totalorder %s18, 0
    %p165 = por %p163, %p164
    %p166 = scmp.le.s32.totalorder 1, %s12
    %p167 = scmp.lt.s32.totalorder %s12, 3
    %p168 = pnand %p166, %p167
    %p169 = pneg %p168
    // Predicated region
    $region9: #{conv_block_x2.2} parent=5 // pred_check
      _
    $region10: #{conv_block_x2.2} parent=5 // pred_check_branch
      %171 = sbr.rel (%p168) target = $region12
    $region11: #{conv_block_x2.2} parent=5 // pred_region
      %s172 = ssub.s32 %s12, 1
      // Predicated region
      $region13: #{conv_block_x2.2} parent=11 // pred_check
        %p173 = pneg %p59
      $region14: #{conv_block_x2.2} parent=11 // pred_check_branch
        %175 = sbr.rel (%p173) target = $region16
      $region15: #{conv_block_x2.2} parent=11 // pred_region
        _
      $region16: #{conv_block_x2.2} parent=11 // pred_fallthru
        _
      // Predicated region
      $region17: #{conv_block_x2.2} parent=11 // pred_check
        %p176 = pneg %p80
      $region18: #{conv_block_x2.2} parent=11 // pred_check_branch
        %178 = sbr.rel (%p176) target = $region20
      $region19: #{conv_block_x2.2} parent=11 // pred_region
        _
      $region20: #{conv_block_x2.2} parent=11 // pred_fallthru
        _
    $region12: #{conv_block_x2.2} parent=5 // pred_fallthru
      _
    %p179 = scmp.lt.s32.totalorder %s12, 2
    // Predicated region
    $region21: #{conv_block_x2.2} parent=5 // pred_check
      %p180 = pneg %p179
    $region22: #{conv_block_x2.2} parent=5 // pred_check_branch
      %182 = sbr.rel (%p180) target = $region24
    $region23: #{conv_block_x2.2} parent=5 // pred_region
      // Predicated region
      $region25: #{conv_block_x2.2} parent=23 // pred_check
        %p183 = pneg %p32
      $region26: #{conv_block_x2.2} parent=23 // pred_check_branch
        %185 = sbr.rel (%p183) target = $region28
      $region27: #{conv_block_x2.2} parent=23 // pred_region
        %p186 = scmp.lt.s32.totalorder %s12, 1
        %s187 = scalar_select %p186, %s12, 1
        %s188 = smul.addr %s187, 32
        %s189 = smul.addr %s188, 4
        %s190 = scalar_lea.vmem %s0, %s189
      $region28: #{conv_block_x2.2} parent=23 // pred_fallthru
        _
    $region24: #{conv_block_x2.2} parent=5 // pred_fallthru
      _
    %p191 = scmp.le.s32.totalorder 1, %s12
    %p192 = scmp.lt.s32.totalorder %s12, 3
    %p193 = pnand %p191, %p192
    %p194 = pneg %p193
    // Predicated region
    $region29: #{conv_block_x2.2} parent=5 // pred_check
      _
    $region30: #{conv_block_x2.2} parent=5 // pred_check_branch
      %196 = sbr.rel (%p193) target = $region32
    $region31: #{conv_block_x2.2} parent=5 // pred_region
      %s197 = ssub.s32 %s12, 1
      %p198 = scmp.lt.s32.totalorder %s17, 1
      %s199 = scalar_select %p198, %s17, 1
      %s200 = smul.addr %s199, 32
      %s201 = smul.addr %s200, 4
      %s202 = scalar_lea.vmem %s0, %s201
      %p203 = pneg %p38
      %p204 = pneg %p35
      %p205 = pneg %p59
      %p206 = pneg %p56
      %p207 = pneg %p80
      %p208 = pneg %p77
      %p209 = pneg %p106
      %p210 = pneg %p103
      %p211 = scmp.lt.s32.totalorder %s17, 1
      %s212 = scalar_select %p211, %s17, 1
      %s213 = smul.addr %s212, 32
      %s214 = smul.addr %s213, 4
      %s215 = scalar_lea.vmem %s3, %s214
      %p216 = pneg %p132
      %p217 = pneg %p129
      %p218 = scmp.lt.s32.totalorder %s17, 1
      %s219 = scalar_select %p218, %s17, 1
      %s220 = scalar_lea.vmem %s4, %s219
      %p221 = pneg %p158
      %p222 = pneg %p155
      %p223 = scmp.lt.s32.totalorder %s17, 1
      %s224 = scalar_select %p223, %s17, 1
      %s225 = scalar_lea.vmem %s5, %s224
      %p226 = scmp.lt.s32.totalorder %s17, 1
      %s227 = scalar_select %p226, %s17, 1
      %s228 = smul.addr %s227, 32
      %s229 = smul.addr %s228, 4
      %s230 = scalar_lea.vmem %s0, %s229
      %p231 = scmp.lt.s32.totalorder %s17, 1
      %s232 = scalar_select %p231, %s17, 1
      %s233 = smul.addr %s232, 32
      %s234 = smul.addr %s233, 4
      %s235 = scalar_lea.vmem %s3, %s234
      %p236 = scmp.lt.s32.totalorder %s17, 1
      %s237 = scalar_select %p236, %s17, 1
      %s238 = scalar_lea.vmem %s4, %s237
      %p239 = scmp.lt.s32.totalorder %s17, 1
      %s240 = scalar_select %p239, %s17, 1
      %s241 = scalar_lea.vmem %s5, %s240
      %v243 = vld [vmem:[%s230] sm:$0xf]
      %v244 = vld [vmem:[%s230 + $0x4] sm:$0xf]
      %v245 = vld [vmem:[%s230 + $0x8] sm:$0xf]
      %v246 = vld [vmem:[%s230 + $0xc] sm:$0xf]
      %v247 = vld [vmem:[%s230 + $0x10] sm:$0xf]
      %v248 = vld [vmem:[%s230 + $0x14] sm:$0xf]
      %v249 = vld [vmem:[%s230 + $0x18] sm:$0xf]
      %v250 = vld [vmem:[%s230 + $0x1c] sm:$0xf]
      %v251 = vld [vmem:[%s230 + $0x20] sm:$0xf]
      %v252 = vld [vmem:[%s230 + $0x24] sm:$0xf]
      %v253 = vld [vmem:[%s230 + $0x28] sm:$0xf]
      %v254 = vld [vmem:[%s230 + $0x2c] sm:$0xf]
      %v255 = vld [vmem:[%s230 + $0x30] sm:$0xf]
      %v256 = vld [vmem:[%s230 + $0x34] sm:$0xf]
      %v257 = vld [vmem:[%s230 + $0x38] sm:$0xf]
      %v258 = vld [vmem:[%s230 + $0x3c] sm:$0xf]
      %v259 = vld [vmem:[%s230 + $0x40] sm:$0xf]
      %v260 = vld [vmem:[%s230 + $0x44] sm:$0xf]
      %v261 = vld [vmem:[%s230 + $0x48] sm:$0xf]
      %v262 = vld [vmem:[%s230 + $0x4c] sm:$0xf]
      %v263 = vld [vmem:[%s230 + $0x50] sm:$0xf]
      %v264 = vld [vmem:[%s230 + $0x54] sm:$0xf]
      %v265 = vld [vmem:[%s230 + $0x58] sm:$0xf]
      %v266 = vld [vmem:[%s230 + $0x5c] sm:$0xf]
      %v267 = vld [vmem:[%s230 + $0x60] sm:$0xf]
      %v268 = vld [vmem:[%s230 + $0x64] sm:$0xf]
      %v269 = vld [vmem:[%s230 + $0x68] sm:$0xf]
      %v270 = vld [vmem:[%s230 + $0x6c] sm:$0xf]
      %v271 = vld [vmem:[%s230 + $0x70] sm:$0xf]
      %v272 = vld [vmem:[%s230 + $0x74] sm:$0xf]
      %v273 = vld [vmem:[%s230 + $0x78] sm:$0xf]
      %v274 = vld [vmem:[%s230 + $0x7c] sm:$0xf]
      %v307 = vunpack.c.l.b16 %v243
      %v308 = vunpack.c.l.b16 %v244
      %v309 = vunpack.c.l.b16 %v245
      %v310 = vunpack.c.l.b16 %v246
      %v311 = vunpack.c.l.b16 %v247
      %v312 = vunpack.c.l.b16 %v248
      %v313 = vunpack.c.l.b16 %v249
      %v314 = vunpack.c.l.b16 %v250
      %v315 = vunpack.c.l.b16 %v251
      %v316 = vunpack.c.l.b16 %v252
      %v317 = vunpack.c.l.b16 %v253
      %v318 = vunpack.c.l.b16 %v254
      %v319 = vunpack.c.l.b16 %v255
      %v320 = vunpack.c.l.b16 %v256
      %v321 = vunpack.c.l.b16 %v257
      %v322 = vunpack.c.l.b16 %v258
      %v323 = vunpack.c.l.b16 %v259
      %v324 = vunpack.c.l.b16 %v260
      %v325 = vunpack.c.l.b16 %v261
      %v326 = vunpack.c.l.b16 %v262
      %v327 = vunpack.c.l.b16 %v263
      %v328 = vunpack.c.l.b16 %v264
      %v329 = vunpack.c.l.b16 %v265
      %v330 = vunpack.c.l.b16 %v266
      %v331 = vunpack.c.l.b16 %v267
      %v332 = vunpack.c.l.b16 %v268
      %v333 = vunpack.c.l.b16 %v269
      %v334 = vunpack.c.l.b16 %v270
      %v335 = vunpack.c.l.b16 %v271
      %v336 = vunpack.c.l.b16 %v272
      %v337 = vunpack.c.l.b16 %v273
      %v338 = vunpack.c.l.b16 %v274
      %v339 = vpack.c.b16 %v308, %v307
      %v340 = vpack.c.b16 %v310, %v309
      %v341 = vpack.c.b16 %v312, %v311
      %v342 = vpack.c.b16 %v314, %v313
      %v343 = vpack.c.b16 %v316, %v315
      %v344 = vpack.c.b16 %v318, %v317
      %v345 = vpack.c.b16 %v320, %v319
      %v346 = vpack.c.b16 %v322, %v321
      %v347 = vpack.c.b16 %v324, %v323
      %v348 = vpack.c.b16 %v326, %v325
      %v349 = vpack.c.b16 %v328, %v327
      %v350 = vpack.c.b16 %v330, %v329
      %v351 = vpack.c.b16 %v332, %v331
      %v352 = vpack.c.b16 %v334, %v333
      %v353 = vpack.c.b16 %v336, %v335
      %v354 = vpack.c.b16 %v338, %v337
      %v356 = vshrl.u32 %v339, 16
      %v358 = vrot.slane %v356, 7
      %v359 = vshll.u32 %v339, 16
      %v361 = vor.u32 %v358, %v359
      %v363 = vshrl.u32 %v340, 16
      %v365 = vrot.slane %v363, 7
      %v366 = vshll.u32 %v340, 16
      %v368 = vor.u32 %v365, %v366
      %v370 = vshrl.u32 %v341, 16
      %v372 = vrot.slane %v370, 7
      %v373 = vshll.u32 %v341, 16
      %v375 = vor.u32 %v372, %v373
      %v377 = vshrl.u32 %v342, 16
      %v379 = vrot.slane %v377, 7
      %v380 = vshll.u32 %v342, 16
      %v382 = vor.u32 %v379, %v380
      %v384 = vshrl.u32 %v343, 16
      %v386 = vrot.slane %v384, 7
      %v387 = vshll.u32 %v343, 16
      %v389 = vor.u32 %v386, %v387
      %v391 = vshrl.u32 %v344, 16
      %v393 = vrot.slane %v391, 7
      %v394 = vshll.u32 %v344, 16
      %v396 = vor.u32 %v393, %v394
      %v398 = vshrl.u32 %v345, 16
      %v400 = vrot.slane %v398, 7
      %v401 = vshll.u32 %v345, 16
      %v403 = vor.u32 %v400, %v401
      %v405 = vshrl.u32 %v346, 16
      %v407 = vrot.slane %v405, 7
      %v408 = vshll.u32 %v346, 16
      %v410 = vor.u32 %v407, %v408
      %v412 = vshrl.u32 %v347, 16
      %v414 = vrot.slane %v412, 7
      %v415 = vshll.u32 %v347, 16
      %v417 = vor.u32 %v414, %v415
      %v419 = vshrl.u32 %v348, 16
      %v421 = vrot.slane %v419, 7
      %v422 = vshll.u32 %v348, 16
      %v424 = vor.u32 %v421, %v422
      %v426 = vshrl.u32 %v349, 16
      %v428 = vrot.slane %v426, 7
      %v429 = vshll.u32 %v349, 16
      %v431 = vor.u32 %v428, %v429
      %v433 = vshrl.u32 %v350, 16
      %v435 = vrot.slane %v433, 7
      %v436 = vshll.u32 %v350, 16
      %v438 = vor.u32 %v435, %v436
      %v440 = vshrl.u32 %v351, 16
      %v442 = vrot.slane %v440, 7
      %v443 = vshll.u32 %v351, 16
      %v445 = vor.u32 %v442, %v443
      %v447 = vshrl.u32 %v352, 16
      %v449 = vrot.slane %v447, 7
      %v450 = vshll.u32 %v352, 16
      %v452 = vor.u32 %v449, %v450
      %v454 = vshrl.u32 %v353, 16
      %v456 = vrot.slane %v454, 7
      %v457 = vshll.u32 %v353, 16
      %v459 = vor.u32 %v456, %v457
      %v461 = vshrl.u32 %v354, 16
      %v463 = vrot.slane %v461, 7
      %v464 = vshll.u32 %v354, 16
      %v466 = vor.u32 %v463, %v464
      %vm483 = vcmask 1040384
      %vm484 = vsmask.f32 256
      %vm485 = vmand %vm483, %vm484
      %v486 = vsel %vm485, 0, %v361
      %v487 = vsel %vm485, 0, %v368
      %v488 = vsel %vm485, 0, %v375
      %v489 = vsel %vm485, 0, %v382
      %v490 = vsel %vm485, 0, %v389
      %v491 = vsel %vm485, 0, %v396
      %v492 = vsel %vm485, 0, %v403
      %v493 = vsel %vm485, 0, %v410
      %v494 = vsel %vm485, 0, %v417
      %v495 = vsel %vm485, 0, %v424
      %v496 = vsel %vm485, 0, %v431
      %v497 = vsel %vm485, 0, %v438
      %v498 = vsel %vm485, 0, %v445
      %v499 = vsel %vm485, 0, %v452
      %v500 = vsel %vm485, 0, %v459
      %v501 = vsel %vm485, 0, %v466
      %v502 = vrot.slane %v359, 1
      %v503 = vor.u32 %v356, %v502
      %v504 = vrot.slane %v366, 1
      %v505 = vor.u32 %v363, %v504
      %v506 = vrot.slane %v373, 1
      %v507 = vor.u32 %v370, %v506
      %v508 = vrot.slane %v380, 1
      %v509 = vor.u32 %v377, %v508
      %v510 = vrot.slane %v387, 1
      %v511 = vor.u32 %v384, %v510
      %v512 = vrot.slane %v394, 1
      %v513 = vor.u32 %v391, %v512
      %v514 = vrot.slane %v401, 1
      %v515 = vor.u32 %v398, %v514
      %v516 = vrot.slane %v408, 1
      %v517 = vor.u32 %v405, %v516
      %v518 = vrot.slane %v415, 1
      %v519 = vor.u32 %v412, %v518
      %v520 = vrot.slane %v422, 1
      %v521 = vor.u32 %v419, %v520
      %v522 = vrot.slane %v429, 1
      %v523 = vor.u32 %v426, %v522
      %v524 = vrot.slane %v436, 1
      %v525 = vor.u32 %v433, %v524
      %v526 = vrot.slane %v443, 1
      %v527 = vor.u32 %v440, %v526
      %v528 = vrot.slane %v450, 1
      %v529 = vor.u32 %v447, %v528
      %v530 = vrot.slane %v457, 1
      %v531 = vor.u32 %v454, %v530
      %v532 = vrot.slane %v464, 1
      %v533 = vor.u32 %v461, %v532
      %vm550 = vcmask 1047552
      %vm551 = vsmask.f32 7424
      %vm552 = vmand %vm550, %vm551
      %v553 = vsel %vm552, %v503, 0
      %v554 = vsel %vm552, %v505, 0
      %v555 = vsel %vm552, %v507, 0
      %v556 = vsel %vm552, %v509, 0
      %v557 = vsel %vm552, %v511, 0
      %v558 = vsel %vm552, %v513, 0
      %v559 = vsel %vm552, %v515, 0
      %v560 = vsel %vm552, %v517, 0
      %v561 = vsel %vm552, %v519, 0
      %v562 = vsel %vm552, %v521, 0
      %v563 = vsel %vm552, %v523, 0
      %v564 = vsel %vm552, %v525, 0
      %v565 = vsel %vm552, %v527, 0
      %v566 = vsel %vm552, %v529, 0
      %v567 = vsel %vm552, %v531, 0
      %v568 = vsel %vm552, %v533, 0
      %569 = vrot.lane.b32.xlu0 %v339, 4
      %v570 = vpop.permute.xlu0 %569
      %571 = vrot.lane.b32.xlu0 %v340, 4
      %v572 = vpop.permute.xlu0 %571
      %573 = vrot.lane.b32.xlu0 %v341, 4
      %v574 = vpop.permute.xlu0 %573
      %575 = vrot.lane.b32.xlu0 %v342, 4
      %v576 = vpop.permute.xlu0 %575
      %577 = vrot.lane.b32.xlu0 %v343, 4
      %v578 = vpop.permute.xlu0 %577
      %579 = vrot.lane.b32.xlu0 %v344, 4
      %v580 = vpop.permute.xlu0 %579
      %581 = vrot.lane.b32.xlu0 %v345, 4
      %v582 = vpop.permute.xlu0 %581
      %583 = vrot.lane.b32.xlu0 %v346, 4
      %v584 = vpop.permute.xlu0 %583
      %585 = vrot.lane.b32.xlu0 %v347, 4
      %v586 = vpop.permute.xlu0 %585
      %587 = vrot.lane.b32.xlu0 %v348, 4
      %v588 = vpop.permute.xlu0 %587
      %589 = vrot.lane.b32.xlu0 %v349, 4
      %v590 = vpop.permute.xlu0 %589
      %591 = vrot.lane.b32.xlu0 %v350, 4
      %v592 = vpop.permute.xlu0 %591
      %593 = vrot.lane.b32.xlu0 %v351, 4
      %v594 = vpop.permute.xlu0 %593
      %595 = vrot.lane.b32.xlu0 %v352, 4
      %v596 = vpop.permute.xlu0 %595
      %597 = vrot.lane.b32.xlu0 %v353, 4
      %v598 = vpop.permute.xlu0 %597
      %599 = vrot.lane.b32.xlu0 %v354, 4
      %v600 = vpop.permute.xlu0 %599
      %617 = vrot.lane.b32.xlu0 %v553, 8
      %v618 = vpop.permute.xlu0 %617
      %619 = vrot.lane.b32.xlu0 %v554, 8
      %v620 = vpop.permute.xlu0 %619
      %621 = vrot.lane.b32.xlu0 %v555, 8
      %v622 = vpop.permute.xlu0 %621
      %623 = vrot.lane.b32.xlu0 %v556, 8
      %v624 = vpop.permute.xlu0 %623
      %625 = vrot.lane.b32.xlu0 %v557, 8
      %v626 = vpop.permute.xlu0 %625
      %627 = vrot.lane.b32.xlu0 %v558, 8
      %v628 = vpop.permute.xlu0 %627
      %629 = vrot.lane.b32.xlu0 %v559, 8
      %v630 = vpop.permute.xlu0 %629
      %631 = vrot.lane.b32.xlu0 %v560, 8
      %v632 = vpop.permute.xlu0 %631
      %633 = vrot.lane.b32.xlu0 %v561, 8
      %v634 = vpop.permute.xlu0 %633
      %635 = vrot.lane.b32.xlu0 %v562, 8
      %v636 = vpop.permute.xlu0 %635
      %637 = vrot.lane.b32.xlu0 %v563, 8
      %v638 = vpop.permute.xlu0 %637
      %639 = vrot.lane.b32.xlu0 %v564, 8
      %v640 = vpop.permute.xlu0 %639
      %641 = vrot.lane.b32.xlu0 %v565, 8
      %v642 = vpop.permute.xlu0 %641
      %643 = vrot.lane.b32.xlu0 %v566, 8
      %v644 = vpop.permute.xlu0 %643
      %645 = vrot.lane.b32.xlu0 %v567, 8
      %v646 = vpop.permute.xlu0 %645
      %647 = vrot.lane.b32.xlu0 %v568, 8
      %v648 = vpop.permute.xlu0 %647
      %vm649 = vcmask 31744
      %v652 = vsel %vm649, %v486, %v570
      %v655 = vsel %vm649, %v487, %v572
      %v658 = vsel %vm649, %v488, %v574
      %v661 = vsel %vm649, %v489, %v576
      %v664 = vsel %vm649, %v490, %v578
      %v667 = vsel %vm649, %v491, %v580
      %v670 = vsel %vm649, %v492, %v582
      %v673 = vsel %vm649, %v493, %v584
      %v676 = vsel %vm649, %v494, %v586
      %v679 = vsel %vm649, %v495, %v588
      %v682 = vsel %vm649, %v496, %v590
      %v685 = vsel %vm649, %v497, %v592
      %v688 = vsel %vm649, %v498, %v594
      %v691 = vsel %vm649, %v499, %v596
      %v694 = vsel %vm649, %v500, %v598
      %v697 = vsel %vm649, %v501, %v600
      %vm698 = vcmask 64512
      %v700 = vsel %vm698, %v652, %v618
      %v702 = vsel %vm698, %v655, %v620
      %v704 = vsel %vm698, %v658, %v622
      %v706 = vsel %vm698, %v661, %v624
      %v708 = vsel %vm698, %v664, %v626
      %v710 = vsel %vm698, %v667, %v628
      %v712 = vsel %vm698, %v670, %v630
      %v714 = vsel %vm698, %v673, %v632
      %v716 = vsel %vm698, %v676, %v634
      %v718 = vsel %vm698, %v679, %v636
      %v720 = vsel %vm698, %v682, %v638
      %v722 = vsel %vm698, %v685, %v640
      %v724 = vsel %vm698, %v688, %v642
      %v726 = vsel %vm698, %v691, %v644
      %v728 = vsel %vm698, %v694, %v646
      %v730 = vsel %vm698, %v697, %v648
      %747 = vrot.lane.b32.xlu0 %v700, 12
      %v748 = vpop.permute.xlu0 %747
      %749 = vrot.lane.b32.xlu0 %v702, 12
      %v750 = vpop.permute.xlu0 %749
      %751 = vrot.lane.b32.xlu0 %v704, 12
      %v752 = vpop.permute.xlu0 %751
      %753 = vrot.lane.b32.xlu0 %v706, 12
      %v754 = vpop.permute.xlu0 %753
      %755 = vrot.lane.b32.xlu0 %v708, 12
      %v756 = vpop.permute.xlu0 %755
      %757 = vrot.lane.b32.xlu0 %v710, 12
      %v758 = vpop.permute.xlu0 %757
      %759 = vrot.lane.b32.xlu0 %v712, 12
      %v760 = vpop.permute.xlu0 %759
      %761 = vrot.lane.b32.xlu0 %v714, 12
      %v762 = vpop.permute.xlu0 %761
      %763 = vrot.lane.b32.xlu0 %v716, 12
      %v764 = vpop.permute.xlu0 %763
      %765 = vrot.lane.b32.xlu0 %v718, 12
      %v766 = vpop.permute.xlu0 %765
      %767 = vrot.lane.b32.xlu0 %v720, 12
      %v768 = vpop.permute.xlu0 %767
      %769 = vrot.lane.b32.xlu0 %v722, 12
      %v770 = vpop.permute.xlu0 %769
      %771 = vrot.lane.b32.xlu0 %v724, 12
      %v772 = vpop.permute.xlu0 %771
      %773 = vrot.lane.b32.xlu0 %v726, 12
      %v774 = vpop.permute.xlu0 %773
      %775 = vrot.lane.b32.xlu0 %v728, 12
      %v776 = vpop.permute.xlu0 %775
      %777 = vrot.lane.b32.xlu0 %v730, 12
      %v778 = vpop.permute.xlu0 %777
      %780 = vrot.lane.b32.xlu0 %v702, 24
      %v781 = vpop.permute.xlu0 %780
      %782 = vrot.lane.b32.xlu0 %v704, 24
      %v783 = vpop.permute.xlu0 %782
      %784 = vrot.lane.b32.xlu0 %v706, 24
      %v785 = vpop.permute.xlu0 %784
      %786 = vrot.lane.b32.xlu0 %v708, 24
      %v787 = vpop.permute.xlu0 %786
      %788 = vrot.lane.b32.xlu0 %v710, 24
      %v789 = vpop.permute.xlu0 %788
      %790 = vrot.lane.b32.xlu0 %v712, 24
      %v791 = vpop.permute.xlu0 %790
      %792 = vrot.lane.b32.xlu0 %v714, 24
      %v793 = vpop.permute.xlu0 %792
      %794 = vrot.lane.b32.xlu0 %v716, 24
      %v795 = vpop.permute.xlu0 %794
      %796 = vrot.lane.b32.xlu0 %v718, 24
      %v797 = vpop.permute.xlu0 %796
      %798 = vrot.lane.b32.xlu0 %v720, 24
      %v799 = vpop.permute.xlu0 %798
      %800 = vrot.lane.b32.xlu0 %v722, 24
      %v801 = vpop.permute.xlu0 %800
      %802 = vrot.lane.b32.xlu0 %v724, 24
      %v803 = vpop.permute.xlu0 %802
      %804 = vrot.lane.b32.xlu0 %v726, 24
      %v805 = vpop.permute.xlu0 %804
      %806 = vrot.lane.b32.xlu0 %v728, 24
      %v807 = vpop.permute.xlu0 %806
      %808 = vrot.lane.b32.xlu0 %v730, 24
      %v809 = vpop.permute.xlu0 %808
      %810 = vrot.lane.b32.xlu0 0, 24
      %v811 = vpop.permute.xlu0 %810
      %vm812 = vcmask 97280
      %v815 = vsel %vm812, 0, %v748
      %v817 = vsel %vm812, %v700, %v750
      %v819 = vsel %vm812, %v702, %v752
      %v821 = vsel %vm812, %v704, %v754
      %v823 = vsel %vm812, %v706, %v756
      %v825 = vsel %vm812, %v708, %v758
      %v827 = vsel %vm812, %v710, %v760
      %v829 = vsel %vm812, %v712, %v762
      %v831 = vsel %vm812, %v714, %v764
      %v833 = vsel %vm812, %v716, %v766
      %v835 = vsel %vm812, %v718, %v768
      %v837 = vsel %vm812, %v720, %v770
      %v839 = vsel %vm812, %v722, %v772
      %v841 = vsel %vm812, %v724, %v774
      %v843 = vsel %vm812, %v726, %v776
      %v845 = vsel %vm812, %v728, %v778
      %vm846 = vcmask 195584
      %v848 = vsel %vm846, %v815, %v781
      %v850 = vsel %vm846, %v817, %v783
      %v852 = vsel %vm846, %v819, %v785
      %v854 = vsel %vm846, %v821, %v787
      %v856 = vsel %vm846, %v823, %v789
      %v858 = vsel %vm846, %v825, %v791
      %v860 = vsel %vm846, %v827, %v793
      %v862 = vsel %vm846, %v829, %v795
      %v864 = vsel %vm846, %v831, %v797
      %v866 = vsel %vm846, %v833, %v799
      %v868 = vsel %vm846, %v835, %v801
      %v870 = vsel %vm846, %v837, %v803
      %v872 = vsel %vm846, %v839, %v805
      %v874 = vsel %vm846, %v841, %v807
      %v876 = vsel %vm846, %v843, %v809
      %v878 = vsel %vm846, %v845, %v811
      %v879 = vld [vmem:[%s1] sm:$0xf]
      %v880 = vld [vmem:[%s1 + $0x4] sm:$0xf]
      %v881 = vld [vmem:[%s1 + $0x8] sm:$0xf]
      %v882 = vld [vmem:[%s1 + $0xc] sm:$0xf]
      %v883 = vld [vmem:[%s1 + $0x10] sm:$0x3]
      %v884 = vld [vmem:[%s2] sm:$0x1]
      %v886 = vperm.slane %v884, 0
      %v893 = vunpack.c.l.b16 %v879
      %v894 = vunpack.c.l.b16 %v880
      %v895 = vunpack.c.l.b16 %v881
      %v896 = vunpack.c.l.b16 %v882
      %v897 = vunpack.c.l.b16 %v883
      %v898 = vpack.c.b16 %v894, %v893
      %v899 = vpack.c.b16 %v896, %v895
      %v900 = vpack.c.b16 %v897, %v897
      %vm903 = vcmask 293888
      %v904 = vsel %vm903, %v848, 0
      %v906 = vsel %vm903, %v850, 0
      %v908 = vsel %vm903, %v852, 0
      %v910 = vsel %vm903, %v854, 0
      %v912 = vsel %vm903, %v856, 0
      %v914 = vsel %vm903, %v858, 0
      %v916 = vsel %vm903, %v860, 0
      %v918 = vsel %vm903, %v862, 0
      %v920 = vsel %vm903, %v864, 0
      %v922 = vsel %vm903, %v866, 0
      %v924 = vsel %vm903, %v868, 0
      %v926 = vsel %vm903, %v870, 0
      %v928 = vsel %vm903, %v872, 0
      %v930 = vsel %vm903, %v874, 0
      %v932 = vsel %vm903, %v876, 0
      %v934 = vsel %vm903, %v878, 0
      %vm936 = vcmask 1041408
      %v938 = vsel %vm936, %v900, 0
      %940 = vmatpush.bf16.msra.mxu0 0
      %941 = vmatpush.bf16.msra.mxu0 0
      %942 = vmatpush.bf16.msra.mxu0 0
      %943 = vmatpush.bf16.msra.mxu0 0
      %944 = vmatpush.bf16.msra.mxu0 0
      %945 = vmatpush.bf16.msra.mxu0 %v938
      %946 = vmatpush.bf16.msra.mxu0 %v899
      %947 = vmatpush.bf16.msra.mxu0 %v898
      %948 = vmatmul.bf16.gmra.mxu0 %v904
      %v949 = vpop.f32.mrf.mxu0
      %v950 = vadd.f32 %v886, %v949
      %v951 = vpop.f32.mrf.mxu0
      %v952 = vadd.f32 %v886, %v951
      %953 = vmatmul.bf16.gmra.mxu0 %v906
      %v954 = vpop.f32.mrf.mxu0
      %v955 = vadd.f32 %v886, %v954
      %v956 = vpop.f32.mrf.mxu0
      %v957 = vadd.f32 %v886, %v956
      %958 = vmatmul.bf16.gmra.mxu0 %v908
      %v959 = vpop.f32.mrf.mxu0
      %v960 = vadd.f32 %v886, %v959
      %v961 = vpop.f32.mrf.mxu0
      %v962 = vadd.f32 %v886, %v961
      %963 = vmatmul.bf16.gmra.mxu0 %v910
      %v964 = vpop.f32.mrf.mxu0
      %v965 = vadd.f32 %v886, %v964
      %v966 = vpop.f32.mrf.mxu0
      %v967 = vadd.f32 %v886, %v966
      %968 = vmatmul.bf16.gmra.mxu0 %v912
      %v969 = vpop.f32.mrf.mxu0
      %v970 = vadd.f32 %v886, %v969
      %v971 = vpop.f32.mrf.mxu0
      %v972 = vadd.f32 %v886, %v971
      %973 = vmatmul.bf16.gmra.mxu0 %v914
      %v974 = vpop.f32.mrf.mxu0
      %v975 = vadd.f32 %v886, %v974
      %v976 = vpop.f32.mrf.mxu0
      %v977 = vadd.f32 %v886, %v976
      %978 = vmatmul.bf16.gmra.mxu0 %v916
      %v979 = vpop.f32.mrf.mxu0
      %v980 = vadd.f32 %v886, %v979
      %v981 = vpop.f32.mrf.mxu0
      %v982 = vadd.f32 %v886, %v981
      %983 = vmatmul.bf16.gmra.mxu0 %v918
      %v984 = vpop.f32.mrf.mxu0
      %v985 = vadd.f32 %v886, %v984
      %v986 = vpop.f32.mrf.mxu0
      %v987 = vadd.f32 %v886, %v986
      %988 = vmatmul.bf16.gmra.mxu0 %v920
      %v989 = vpop.f32.mrf.mxu0
      %v990 = vadd.f32 %v886, %v989
      %v991 = vpop.f32.mrf.mxu0
      %v992 = vadd.f32 %v886, %v991
      %993 = vmatmul.bf16.gmra.mxu0 %v922
      %v994 = vpop.f32.mrf.mxu0
      %v995 = vadd.f32 %v886, %v994
      %v996 = vpop.f32.mrf.mxu0
      %v997 = vadd.f32 %v886, %v996
      %998 = vmatmul.bf16.gmra.mxu0 %v924
      %v999 = vpop.f32.mrf.mxu0
      %v1000 = vadd.f32 %v886, %v999
      %v1001 = vpop.f32.mrf.mxu0
      %v1002 = vadd.f32 %v886, %v1001
      %1003 = vmatmul.bf16.gmra.mxu0 %v926
      %v1004 = vpop.f32.mrf.mxu0
      %v1005 = vadd.f32 %v886, %v1004
      %v1006 = vpop.f32.mrf.mxu0
      %v1007 = vadd.f32 %v886, %v1006
      %1008 = vmatmul.bf16.gmra.mxu0 %v928
      %v1009 = vpop.f32.mrf.mxu0
      %v1010 = vadd.f32 %v886, %v1009
      %v1011 = vpop.f32.mrf.mxu0
      %v1012 = vadd.f32 %v886, %v1011
      %1013 = vmatmul.bf16.gmra.mxu0 %v930
      %v1014 = vpop.f32.mrf.mxu0
      %v1015 = vadd.f32 %v886, %v1014
      %v1016 = vpop.f32.mrf.mxu0
      %v1017 = vadd.f32 %v886, %v1016
      %1018 = vmatmul.bf16.gmra.mxu0 %v932
      %v1019 = vpop.f32.mrf.mxu0
      %v1020 = vadd.f32 %v886, %v1019
      %v1021 = vpop.f32.mrf.mxu0
      %v1022 = vadd.f32 %v886, %v1021
      %1023 = vmatmul.bf16.gmra.mxu0 %v934
      %v1024 = vpop.f32.mrf.mxu0
      %v1025 = vadd.f32 %v886, %v1024
      %v1026 = vpop.f32.mrf.mxu0
      %v1027 = vadd.f32 %v886, %v1026
      %1028 = vdwg.mxu0
      %v1029 = vpack.c.bf16 %v950, %v950
      %v1030 = vpack.c.bf16 %v952, %v952
      %v1031 = vpack.c.bf16 %v955, %v955
      %v1032 = vpack.c.bf16 %v957, %v957
      %v1033 = vpack.c.bf16 %v960, %v960
      %v1034 = vpack.c.bf16 %v962, %v962
      %v1035 = vpack.c.bf16 %v965, %v965
      %v1036 = vpack.c.bf16 %v967, %v967
      %v1037 = vpack.c.bf16 %v970, %v970
      %v1038 = vpack.c.bf16 %v972, %v972
      %v1039 = vpack.c.bf16 %v975, %v975
      %v1040 = vpack.c.bf16 %v977, %v977
      %v1041 = vpack.c.bf16 %v980, %v980
      %v1042 = vpack.c.bf16 %v982, %v982
      %v1043 = vpack.c.bf16 %v985, %v985
      %v1044 = vpack.c.bf16 %v987, %v987
      %v1045 = vpack.c.bf16 %v990, %v990
      %v1046 = vpack.c.bf16 %v992, %v992
      %v1047 = vpack.c.bf16 %v995, %v995
      %v1048 = vpack.c.bf16 %v997, %v997
      %v1049 = vpack.c.bf16 %v1000, %v1000
      %v1050 = vpack.c.bf16 %v1002, %v1002
      %v1051 = vpack.c.bf16 %v1005, %v1005
      %v1052 = vpack.c.bf16 %v1007, %v1007
      %v1053 = vpack.c.bf16 %v1010, %v1010
      %v1054 = vpack.c.bf16 %v1012, %v1012
      %v1055 = vpack.c.bf16 %v1015, %v1015
      %v1056 = vpack.c.bf16 %v1017, %v1017
      %v1057 = vpack.c.bf16 %v1020, %v1020
      %v1058 = vpack.c.bf16 %v1022, %v1022
      %v1059 = vpack.c.bf16 %v1025, %v1025
      %v1060 = vpack.c.bf16 %v1027, %v1027
      %vm1061 = vcmask 60416
      %1062 = vst.msk [vmem:[%s235] sm:$0xf] %vm1061, %v1029
      %1063 = vst.msk [vmem:[%s235 + $0x4] sm:$0xf] %vm1061, %v1030
      %1064 = vst.msk [vmem:[%s235 + $0x8] sm:$0xf] %vm1061, %v1031
      %1065 = vst.msk [vmem:[%s235 + $0xc] sm:$0xf] %vm1061, %v1032
      %1066 = vst.msk [vmem:[%s235 + $0x10] sm:$0xf] %vm1061, %v1033
      %1067 = vst.msk [vmem:[%s235 + $0x14] sm:$0xf] %vm1061, %v1034
      %1068 = vst.msk [vmem:[%s235 + $0x18] sm:$0xf] %vm1061, %v1035
      %1069 = vst.msk [vmem:[%s235 + $0x1c] sm:$0xf] %vm1061, %v1036
      %1070 = vst.msk [vmem:[%s235 + $0x20] sm:$0xf] %vm1061, %v1037
      %1071 = vst.msk [vmem:[%s235 + $0x24] sm:$0xf] %vm1061, %v1038
      %1072 = vst.msk [vmem:[%s235 + $0x28] sm:$0xf] %vm1061, %v1039
      %1073 = vst.msk [vmem:[%s235 + $0x2c] sm:$0xf] %vm1061, %v1040
      %1074 = vst.msk [vmem:[%s235 + $0x30] sm:$0xf] %vm1061, %v1041
      %1075 = vst.msk [vmem:[%s235 + $0x34] sm:$0xf] %vm1061, %v1042
      %1076 = vst.msk [vmem:[%s235 + $0x38] sm:$0xf] %vm1061, %v1043
      %1077 = vst.msk [vmem:[%s235 + $0x3c] sm:$0xf] %vm1061, %v1044
      %1078 = vst.msk [vmem:[%s235 + $0x40] sm:$0xf] %vm1061, %v1045
      %1079 = vst.msk [vmem:[%s235 + $0x44] sm:$0xf] %vm1061, %v1046
      %1080 = vst.msk [vmem:[%s235 + $0x48] sm:$0xf] %vm1061, %v1047
      %1081 = vst.msk [vmem:[%s235 + $0x4c] sm:$0xf] %vm1061, %v1048
      %1082 = vst.msk [vmem:[%s235 + $0x50] sm:$0xf] %vm1061, %v1049
      %1083 = vst.msk [vmem:[%s235 + $0x54] sm:$0xf] %vm1061, %v1050
      %1084 = vst.msk [vmem:[%s235 + $0x58] sm:$0xf] %vm1061, %v1051
      %1085 = vst.msk [vmem:[%s235 + $0x5c] sm:$0xf] %vm1061, %v1052
      %1086 = vst.msk [vmem:[%s235 + $0x60] sm:$0xf] %vm1061, %v1053
      %1087 = vst.msk [vmem:[%s235 + $0x64] sm:$0xf] %vm1061, %v1054
      %1088 = vst.msk [vmem:[%s235 + $0x68] sm:$0xf] %vm1061, %v1055
      %1089 = vst.msk [vmem:[%s235 + $0x6c] sm:$0xf] %vm1061, %v1056
      %1090 = vst.msk [vmem:[%s235 + $0x70] sm:$0xf] %vm1061, %v1057
      %1091 = vst.msk [vmem:[%s235 + $0x74] sm:$0xf] %vm1061, %v1058
      %1092 = vst.msk [vmem:[%s235 + $0x78] sm:$0xf] %vm1061, %v1059
      %1093 = vst.msk [vmem:[%s235 + $0x7c] sm:$0xf] %vm1061, %v1060
      %v1094 = vsel %vm698, %v950, 0.0
      %v1095 = vsel %vm698, %v952, 0.0
      %v1096 = vadd.f32 %v1094, %v1095
      %v1097 = vsel %vm698, %v955, 0.0
      %v1098 = vadd.f32 %v1096, %v1097
      %v1099 = vsel %vm698, %v957, 0.0
      %v1100 = vadd.f32 %v1098, %v1099
      %v1101 = vsel %vm698, %v960, 0.0
      %v1102 = vadd.f32 %v1100, %v1101
      %v1103 = vsel %vm698, %v962, 0.0
      %v1104 = vadd.f32 %v1102, %v1103
      %v1105 = vsel %vm698, %v965, 0.0
      %v1106 = vadd.f32 %v1104, %v1105
      %v1107 = vsel %vm698, %v967, 0.0
      %v1108 = vadd.f32 %v1106, %v1107
      %v1109 = vsel %vm698, %v970, 0.0
      %v1110 = vadd.f32 %v1108, %v1109
      %v1111 = vsel %vm698, %v972, 0.0
      %v1112 = vadd.f32 %v1110, %v1111
      %v1113 = vsel %vm698, %v975, 0.0
      %v1114 = vadd.f32 %v1112, %v1113
      %v1115 = vsel %vm698, %v977, 0.0
      %v1116 = vadd.f32 %v1114, %v1115
      %v1117 = vsel %vm698, %v980, 0.0
      %v1118 = vadd.f32 %v1116, %v1117
      %v1119 = vsel %vm698, %v982, 0.0
      %v1120 = vadd.f32 %v1118, %v1119
      %v1121 = vsel %vm698, %v985, 0.0
      %v1122 = vadd.f32 %v1120, %v1121
      %v1123 = vsel %vm698, %v987, 0.0
      %v1124 = vadd.f32 %v1122, %v1123
      %v1125 = vsel %vm698, %v990, 0.0
      %v1126 = vadd.f32 %v1124, %v1125
      %v1127 = vsel %vm698, %v992, 0.0
      %v1128 = vadd.f32 %v1126, %v1127
      %v1129 = vsel %vm698, %v995, 0.0
      %v1130 = vadd.f32 %v1128, %v1129
      %v1131 = vsel %vm698, %v997, 0.0
      %v1132 = vadd.f32 %v1130, %v1131
      %v1133 = vsel %vm698, %v1000, 0.0
      %v1134 = vadd.f32 %v1132, %v1133
      %v1135 = vsel %vm698, %v1002, 0.0
      %v1136 = vadd.f32 %v1134, %v1135
      %v1137 = vsel %vm698, %v1005, 0.0
      %v1138 = vadd.f32 %v1136, %v1137
      %v1139 = vsel %vm698, %v1007, 0.0
      %v1140 = vadd.f32 %v1138, %v1139
      %v1141 = vsel %vm698, %v1010, 0.0
      %v1142 = vadd.f32 %v1140, %v1141
      %v1143 = vsel %vm698, %v1012, 0.0
      %v1144 = vadd.f32 %v1142, %v1143
      %v1145 = vsel %vm698, %v1015, 0.0
      %v1146 = vadd.f32 %v1144, %v1145
      %v1147 = vsel %vm698, %v1017, 0.0
      %v1148 = vadd.f32 %v1146, %v1147
      %v1149 = vsel %vm698, %v1020, 0.0
      %v1150 = vadd.f32 %v1148, %v1149
      %v1151 = vsel %vm698, %v1022, 0.0
      %v1152 = vadd.f32 %v1150, %v1151
      %v1153 = vsel %vm698, %v1025, 0.0
      %v1154 = vadd.f32 %v1152, %v1153
      %v1155 = vsel %vm698, %v1027, 0.0
      %v1156 = vadd.f32 %v1154, %v1155
      %v1157 = vrot.slane %v1156, 4
      %v1158 = vadd.f32 %v1156, %v1157
      %v1159 = vrot.slane %v1158, 2
      %v1160 = vadd.f32 %v1158, %v1159
      %v1161 = vrot.slane %v1160, 1
      %v1162 = vadd.f32 %v1160, %v1161
      %v1163 = vrcp.pop 256.0
      %v1164 = vmul.f32 256.0, %v1163
      %v1165 = vsub.f32 1.0, %v1164
      %v1166 = vmul.f32 %v1163, %v1165
      %v1167 = vadd.f32 %v1163, %v1166
      %vm1168 = vweird.f32 %v1163
      %v1169 = vsel %vm1168, %v1163, %v1167
      %v1170 = vmul.f32 %v1162, %v1169
      %v1171 = vsub.f32 %v950, %v1170
      %v1172 = vsub.f32 %v952, %v1170
      %v1173 = vsub.f32 %v955, %v1170
      %v1174 = vsub.f32 %v957, %v1170
      %v1175 = vsub.f32 %v960, %v1170
      %v1176 = vsub.f32 %v962, %v1170
      %v1177 = vsub.f32 %v965, %v1170
      %v1178 = vsub.f32 %v967, %v1170
      %v1179 = vsub.f32 %v970, %v1170
      %v1180 = vsub.f32 %v972, %v1170
      %v1181 = vsub.f32 %v975, %v1170
      %v1182 = vsub.f32 %v977, %v1170
      %v1183 = vsub.f32 %v980, %v1170
      %v1184 = vsub.f32 %v982, %v1170
      %v1185 = vsub.f32 %v985, %v1170
      %v1186 = vsub.f32 %v987, %v1170
      %v1187 = vsub.f32 %v990, %v1170
      %v1188 = vsub.f32 %v992, %v1170
      %v1189 = vsub.f32 %v995, %v1170
      %v1190 = vsub.f32 %v997, %v1170
      %v1191 = vsub.f32 %v1000, %v1170
      %v1192 = vsub.f32 %v1002, %v1170
      %v1193 = vsub.f32 %v1005, %v1170
      %v1194 = vsub.f32 %v1007, %v1170
      %v1195 = vsub.f32 %v1010, %v1170
      %v1196 = vsub.f32 %v1012, %v1170
      %v1197 = vsub.f32 %v1015, %v1170
      %v1198 = vsub.f32 %v1017, %v1170
      %v1199 = vsub.f32 %v1020, %v1170
      %v1200 = vsub.f32 %v1022, %v1170
      %v1201 = vsub.f32 %v1025, %v1170
      %v1202 = vsub.f32 %v1027, %v1170
      %vm1203 = vcmask 57344
      %1204 = vst.msk [vmem:[%s238] sm:$0x1] %vm1203, %v1170
      %v1205 = vmul.f32 %v1171, %v1171
      %v1206 = vmul.f32 %v1172, %v1172
      %v1207 = vmul.f32 %v1173, %v1173
      %v1208 = vmul.f32 %v1174, %v1174
      %v1209 = vmul.f32 %v1175, %v1175
      %v1210 = vmul.f32 %v1176, %v1176
      %v1211 = vmul.f32 %v1177, %v1177
      %v1212 = vmul.f32 %v1178, %v1178
      %v1213 = vmul.f32 %v1179, %v1179
      %v1214 = vmul.f32 %v1180, %v1180
      %v1215 = vmul.f32 %v1181, %v1181
      %v1216 = vmul.f32 %v1182, %v1182
      %v1217 = vmul.f32 %v1183, %v1183
      %v1218 = vmul.f32 %v1184, %v1184
      %v1219 = vmul.f32 %v1185, %v1185
      %v1220 = vmul.f32 %v1186, %v1186
      %v1221 = vmul.f32 %v1187, %v1187
      %v1222 = vmul.f32 %v1188, %v1188
      %v1223 = vmul.f32 %v1189, %v1189
      %v1224 = vmul.f32 %v1190, %v1190
      %v1225 = vmul.f32 %v1191, %v1191
      %v1226 = vmul.f32 %v1192, %v1192
      %v1227 = vmul.f32 %v1193, %v1193
      %v1228 = vmul.f32 %v1194, %v1194
      %v1229 = vmul.f32 %v1195, %v1195
      %v1230 = vmul.f32 %v1196, %v1196
      %v1231 = vmul.f32 %v1197, %v1197
      %v1232 = vmul.f32 %v1198, %v1198
      %v1233 = vmul.f32 %v1199, %v1199
      %v1234 = vmul.f32 %v1200, %v1200
      %v1235 = vmul.f32 %v1201, %v1201
      %v1236 = vmul.f32 %v1202, %v1202
      %v1237 = vsel %vm698, %v1205, 0.0
      %v1238 = vsel %vm698, %v1206, 0.0
      %v1239 = vadd.f32 %v1237, %v1238
      %v1240 = vsel %vm698, %v1207, 0.0
      %v1241 = vadd.f32 %v1239, %v1240
      %v1242 = vsel %vm698, %v1208, 0.0
      %v1243 = vadd.f32 %v1241, %v1242
      %v1244 = vsel %vm698, %v1209, 0.0
      %v1245 = vadd.f32 %v1243, %v1244
      %v1246 = vsel %vm698, %v1210, 0.0
      %v1247 = vadd.f32 %v1245, %v1246
      %v1248 = vsel %vm698, %v1211, 0.0
      %v1249 = vadd.f32 %v1247, %v1248
      %v1250 = vsel %vm698, %v1212, 0.0
      %v1251 = vadd.f32 %v1249, %v1250
      %v1252 = vsel %vm698, %v1213, 0.0
      %v1253 = vadd.f32 %v1251, %v1252
      %v1254 = vsel %vm698, %v1214, 0.0
      %v1255 = vadd.f32 %v1253, %v1254
      %v1256 = vsel %vm698, %v1215, 0.0
      %v1257 = vadd.f32 %v1255, %v1256
      %v1258 = vsel %vm698, %v1216, 0.0
      %v1259 = vadd.f32 %v1257, %v1258
      %v1260 = vsel %vm698, %v1217, 0.0
      %v1261 = vadd.f32 %v1259, %v1260
      %v1262 = vsel %vm698, %v1218, 0.0
      %v1263 = vadd.f32 %v1261, %v1262
      %v1264 = vsel %vm698, %v1219, 0.0
      %v1265 = vadd.f32 %v1263, %v1264
      %v1266 = vsel %vm698, %v1220, 0.0
      %v1267 = vadd.f32 %v1265, %v1266
      %v1268 = vsel %vm698, %v1221, 0.0
      %v1269 = vadd.f32 %v1267, %v1268
      %v1270 = vsel %vm698, %v1222, 0.0
      %v1271 = vadd.f32 %v1269, %v1270
      %v1272 = vsel %vm698, %v1223, 0.0
      %v1273 = vadd.f32 %v1271, %v1272
      %v1274 = vsel %vm698, %v1224, 0.0
      %v1275 = vadd.f32 %v1273, %v1274
      %v1276 = vsel %vm698, %v1225, 0.0
      %v1277 = vadd.f32 %v1275, %v1276
      %v1278 = vsel %vm698, %v1226, 0.0
      %v1279 = vadd.f32 %v1277, %v1278
      %v1280 = vsel %vm698, %v1227, 0.0
      %v1281 = vadd.f32 %v1279, %v1280
      %v1282 = vsel %vm698, %v1228, 0.0
      %v1283 = vadd.f32 %v1281, %v1282
      %v1284 = vsel %vm698, %v1229, 0.0
      %v1285 = vadd.f32 %v1283, %v1284
      %v1286 = vsel %vm698, %v1230, 0.0
      %v1287 = vadd.f32 %v1285, %v1286
      %v1288 = vsel %vm698, %v1231, 0.0
      %v1289 = vadd.f32 %v1287, %v1288
      %v1290 = vsel %vm698, %v1232, 0.0
      %v1291 = vadd.f32 %v1289, %v1290
      %v1292 = vsel %vm698, %v1233, 0.0
      %v1293 = vadd.f32 %v1291, %v1292
      %v1294 = vsel %vm698, %v1234, 0.0
      %v1295 = vadd.f32 %v1293, %v1294
      %v1296 = vsel %vm698, %v1235, 0.0
      %v1297 = vadd.f32 %v1295, %v1296
      %v1298 = vsel %vm698, %v1236, 0.0
      %v1299 = vadd.f32 %v1297, %v1298
      %v1300 = vrot.slane %v1299, 4
      %v1301 = vadd.f32 %v1299, %v1300
      %v1302 = vrot.slane %v1301, 2
      %v1303 = vadd.f32 %v1301, %v1302
      %v1304 = vrot.slane %v1303, 1
      %v1305 = vadd.f32 %v1303, %v1304
      %1306 = vst.msk [vmem:[%s241] sm:$0x1] %vm1203, %v1305
      %p1307 = scmp.lt.s32.totalorder %s17, 1
      %s1308 = scalar_select %p1307, %s17, 1
      %s1309 = smul.addr %s1308, 32
      %s1310 = smul.addr %s1309, 4
      %s1311 = scalar_lea.vmem %s3, %s1310
      %p1312 = scmp.lt.s32.totalorder %s17, 1
      %s1313 = scalar_select %p1312, %s17, 1
      %s1314 = scalar_lea.vmem %s4, %s1313
      %p1315 = scmp.lt.s32.totalorder %s17, 1
      %s1316 = scalar_select %p1315, %s17, 1
      %s1317 = scalar_lea.vmem %s5, %s1316
      // Predicated region
      $region33: #{conv_block_x2.2} parent=31 // pred_check
        %p1318 = pneg %p103
      $region34: #{conv_block_x2.2} parent=31 // pred_check_branch
        %1320 = sbr.rel (%p1318) target = $region36
      $region35: #{conv_block_x2.2} parent=31 // pred_region
        _
      $region36: #{conv_block_x2.2} parent=31 // pred_fallthru
        _
      // Predicated region
      $region37: #{conv_block_x2.2} parent=31 // pred_check
        %p1321 = pneg %p129
      $region38: #{conv_block_x2.2} parent=31 // pred_check_branch
        %1323 = sbr.rel (%p1321) target = $region40
      $region39: #{conv_block_x2.2} parent=31 // pred_region
        _
      $region40: #{conv_block_x2.2} parent=31 // pred_fallthru
        _
      // Predicated region
      $region41: #{conv_block_x2.2} parent=31 // pred_check
        %p1324 = pneg %p155
      $region42: #{conv_block_x2.2} parent=31 // pred_check_branch
        %1326 = sbr.rel (%p1324) target = $region44
      $region43: #{conv_block_x2.2} parent=31 // pred_region
        _
      $region44: #{conv_block_x2.2} parent=31 // pred_fallthru
        _
    $region32: #{conv_block_x2.2} parent=5 // pred_fallthru
      _
    %p1327 = scmp.le.s32.totalorder 2, %s12
    // Predicated region
    $region45: #{conv_block_x2.2} parent=5 // pred_check
      %p1328 = pneg %p1327
    $region46: #{conv_block_x2.2} parent=5 // pred_check_branch
      %1330 = sbr.rel (%p1328) target = $region48
    $region47: #{conv_block_x2.2} parent=5 // pred_region
      %s1331 = ssub.s32 %s12, 2
      // Predicated region
      $region49: #{conv_block_x2.2} parent=47 // pred_check
        %p1332 = pneg %p109
      $region50: #{conv_block_x2.2} parent=47 // pred_check_branch
        %1334 = sbr.rel (%p1332) target = $region52
      $region51: #{conv_block_x2.2} parent=47 // pred_region
        %p1335 = scmp.lt.s32.totalorder %s18, 1
        %s1336 = scalar_select %p1335, %s18, 1
        %s1337 = smul.addr %s1336, 32
        %s1338 = smul.addr %s1337, 4
        %s1339 = scalar_lea.vmem %s3, %s1338
      $region52: #{conv_block_x2.2} parent=47 // pred_fallthru
        _
      // Predicated region
      $region53: #{conv_block_x2.2} parent=47 // pred_check
        %p1340 = pneg %p135
      $region54: #{conv_block_x2.2} parent=47 // pred_check_branch
        %1342 = sbr.rel (%p1340) target = $region56
      $region55: #{conv_block_x2.2} parent=47 // pred_region
        %p1343 = scmp.lt.s32.totalorder %s18, 1
        %s1344 = scalar_select %p1343, %s18, 1
        %s1345 = scalar_lea.vmem %s4, %s1344
      $region56: #{conv_block_x2.2} parent=47 // pred_fallthru
        _
      // Predicated region
      $region57: #{conv_block_x2.2} parent=47 // pred_check
        %p1346 = pneg %p161
      $region58: #{conv_block_x2.2} parent=47 // pred_check_branch
        %1348 = sbr.rel (%p1346) target = $region60
      $region59: #{conv_block_x2.2} parent=47 // pred_region
        %p1349 = scmp.lt.s32.totalorder %s18, 1
        %s1350 = scalar_select %p1349, %s18, 1
        %s1351 = scalar_lea.vmem %s5, %s1350
      $region60: #{conv_block_x2.2} parent=47 // pred_fallthru
        _
    $region48: #{conv_block_x2.2} parent=5 // pred_fallthru
      _
  $region6: #{conv_block_x2.2} parent=0 // loop_footer
    %s16 = sadd.s32 1, %s12
  $region7: #{conv_block_x2.2} parent=0 // loop_footer_branch
    %11 = sbr.rel target = $region3
  $region8: #{conv_block_x2.2} parent=0 // loop_exit
    _

// kernel: conv_block_x2.3
$region0: #{conv_block_x2.3}
  #allocation0 [shape = 'u32[]', space=smem, size = 0x4, offset = 0x4, fixed_abs, tag = 'smem constant byte address 0x4 - core index']
  #allocation1 [shape = 'u32[72,128]{1,0:T(1,128)}', space=vmem, size = 0x9000, scoped, tag = 'internal scratch']
  %s0 = inlined_call_operand.vmem [shape: bf16[2,16,16,8], index: 0, kind: input, shape index: {}]
  %s1 = inlined_call_operand.vmem [shape: f32[1,8], index: 1, kind: input, shape index: {}]
  %s2 = inlined_call_operand.vmem [shape: f32[1,8], index: 2, kind: input, shape index: {}]
  %s3 = inlined_call_operand.vmem [shape: bf16[72,8], index: 3, kind: input, shape index: {}]
  %s4 = inlined_call_operand.vmem [shape: f32[1,8], index: 4, kind: input, shape index: {}]
  %s5 = inlined_call_operand.vmem [shape: bf16[2,16,16,8], index: 5, kind: output, shape index: {0}]
  %s6 = inlined_call_operand.vmem [shape: f32[2,1,8], index: 6, kind: output, shape index: {1}]
  %s7 = inlined_call_operand.vmem [shape: f32[2,1,8], index: 7, kind: output, shape index: {2}]
  %8 = xla_tuple %s5, %s6, %s7
  %s9 = sld [smem:[#allocation0]]
  $region69: #{conv_block_x2.3} parent=0
    _
  %s11 = ssub.s32 1, %s9
  %s12 = scalar_select 0, %s11, %s9
  loop: start=0, step=1, limit=4
  $region2: #{conv_block_x2.3} parent=0 // loop_pre_header
    _
  $region3: #{conv_block_x2.3} parent=0 // loop_header
    %s14 = sphi 0, %s18
    %p15 = scmp.ge.s32.totalorder %s14, 4
    %s24 = sphi 0, %s26
    %s27 = sphi 0, %s24
    %s28 = sphi 0, %s27
    %s44 = sphi 0, %s28
    %s48 = sphi 0, %s48
    %s50 = sphi 0, %s48
    %s51 = sphi 0, %s50
    %s65 = sphi 0, %s51
    %s69 = sphi 0, %s69
    %s71 = sphi 0, %s69
    %s72 = sphi 0, %s71
    %s86 = sphi 0, %s72
    %s90 = sphi 0, %s90
    %s92 = sphi 0, %s90
    %s93 = sphi 0, %s92
    %s107 = sphi 0, %s93
    %s111 = sphi 0, %s111
    %s113 = sphi 0, %s111
    %s114 = sphi 0, %s113
    %s128 = sphi 0, %s114
    %s134 = sphi 0, %s136
    %s137 = sphi 0, %s134
    %s138 = sphi 0, %s137
    %s154 = sphi 0, %s138
    %s160 = sphi 0, %s162
    %s163 = sphi 0, %s160
    %s164 = sphi 0, %s163
    %s180 = sphi 0, %s164
    %s186 = sphi 0, %s188
    %s189 = sphi 0, %s186
    %s190 = sphi 0, %s189
    %s206 = sphi 0, %s190
  $region4: #{conv_block_x2.3} parent=0 // loop_header_branch
    %17 = sbr.rel (%p15) target = $region8
  $region5: #{conv_block_x2.3} parent=0 // loop_body
    %s19 = ssub.s32 %s14, 1
    %s20 = ssub.s32 %s14, 2
    %s21 = sadd.s32 %s14, 1
    %s22 = ssub.s32 %s14, %s21
    %p23 = scmp.eq.s32.totalorder %s22, 0
    %s25 = sadd.s32 %s24, 1
    %s26 = scalar_select %p23, %s24, %s25
    %p29 = pneg %p23
    %p30 = scmp.eq.s32.totalorder %s14, 1
    %p31 = por %p29, %p30
    %p32 = scmp.ne.s32.totalorder %s24, %s27
    %p33 = scmp.eq.s32.totalorder %s14, 0
    %p34 = por %p32, %p33
    %p35 = scmp.ne.s32.totalorder %s24, %s27
    %p36 = scmp.eq.s32.totalorder %s19, 1
    %p37 = por %p35, %p36
    %p38 = scmp.ne.s32.totalorder %s27, %s28
    %p39 = scmp.eq.s32.totalorder %s19, 0
    %p40 = por %p38, %p39
    %p41 = scmp.ne.s32.totalorder %s27, %s28
    %p42 = scmp.eq.s32.totalorder %s20, 1
    %p43 = por %p41, %p42
    %p45 = scmp.ne.s32.totalorder %s28, %s44
    %p46 = scmp.eq.s32.totalorder %s20, 0
    %p47 = por %p45, %p46
    %s49 = sadd.s32 %s48, 1
    %p52 = scmp.eq.s32.totalorder %s14, 1
    %p53 = scmp.ne.s32.totalorder %s48, %s50
    %p54 = scmp.eq.s32.totalorder %s14, 0
    %p55 = por %p53, %p54
    %p56 = scmp.ne.s32.totalorder %s48, %s50
    %p57 = scmp.eq.s32.totalorder %s19, 1
    %p58 = por %p56, %p57
    %p59 = scmp.ne.s32.totalorder %s50, %s51
    %p60 = scmp.eq.s32.totalorder %s19, 0
    %p61 = por %p59, %p60
    %p62 = scmp.ne.s32.totalorder %s50, %s51
    %p63 = scmp.eq.s32.totalorder %s20, 1
    %p64 = por %p62, %p63
    %p66 = scmp.ne.s32.totalorder %s51, %s65
    %p67 = scmp.eq.s32.totalorder %s20, 0
    %p68 = por %p66, %p67
    %s70 = sadd.s32 %s69, 1
    %p73 = scmp.eq.s32.totalorder %s14, 1
    %p74 = scmp.ne.s32.totalorder %s69, %s71
    %p75 = scmp.eq.s32.totalorder %s14, 0
    %p76 = por %p74, %p75
    %p77 = scmp.ne.s32.totalorder %s69, %s71
    %p78 = scmp.eq.s32.totalorder %s19, 1
    %p79 = por %p77, %p78
    %p80 = scmp.ne.s32.totalorder %s71, %s72
    %p81 = scmp.eq.s32.totalorder %s19, 0
    %p82 = por %p80, %p81
    %p83 = scmp.ne.s32.totalorder %s71, %s72
    %p84 = scmp.eq.s32.totalorder %s20, 1
    %p85 = por %p83, %p84
    %p87 = scmp.ne.s32.totalorder %s72, %s86
    %p88 = scmp.eq.s32.totalorder %s20, 0
    %p89 = por %p87, %p88
    %s91 = sadd.s32 %s90, 1
    %p94 = scmp.eq.s32.totalorder %s14, 1
    %p95 = scmp.ne.s32.totalorder %s90, %s92
    %p96 = scmp.eq.s32.totalorder %s14, 0
    %p97 = por %p95, %p96
    %p98 = scmp.ne.s32.totalorder %s90, %s92
    %p99 = scmp.eq.s32.totalorder %s19, 1
    %p100 = por %p98, %p99
    %p101 = scmp.ne.s32.totalorder %s92, %s93
    %p102 = scmp.eq.s32.totalorder %s19, 0
    %p103 = por %p101, %p102
    %p104 = scmp.ne.s32.totalorder %s92, %s93
    %p105 = scmp.eq.s32.totalorder %s20, 1
    %p106 = por %p104, %p105
    %p108 = scmp.ne.s32.totalorder %s93, %s107
    %p109 = scmp.eq.s32.totalorder %s20, 0
    %p110 = por %p108, %p109
    %s112 = sadd.s32 %s111, 1
    %p115 = scmp.eq.s32.totalorder %s14, 1
    %p116 = scmp.ne.s32.totalorder %s111, %s113
    %p117 = scmp.eq.s32.totalorder %s14, 0
    %p118 = por %p116, %p117
    %p119 = scmp.ne.s32.totalorder %s111, %s113
    %p120 = scmp.eq.s32.totalorder %s19, 1
    %p121 = por %p119, %p120
    %p122 = scmp.ne.s32.totalorder %s113, %s114
    %p123 = scmp.eq.s32.totalorder %s19, 0
    %p124 = por %p122, %p123
    %p125 = scmp.ne.s32.totalorder %s113, %s114
    %p126 = scmp.eq.s32.totalorder %s20, 1
    %p127 = por %p125, %p126
    %p129 = scmp.ne.s32.totalorder %s114, %s128
    %p130 = scmp.eq.s32.totalorder %s20, 0
    %p131 = por %p129, %p130
    %s132 = ssub.s32 %s14, %s21
    %p133 = scmp.eq.s32.totalorder %s132, 0
    %s135 = sadd.s32 %s134, 1
    %s136 = scalar_select %p133, %s134, %s135
    %p139 = pneg %p133
    %p140 = scmp.eq.s32.totalorder %s14, 1
    %p141 = por %p139, %p140
    %p142 = scmp.ne.s32.totalorder %s134, %s137
    %p143 = scmp.eq.s32.totalorder %s14, 0
    %p144 = por %p142, %p143
    %p145 = scmp.ne.s32.totalorder %s134, %s137
    %p146 = scmp.eq.s32.totalorder %s19, 1
    %p147 = por %p145, %p146
    %p148 = scmp.ne.s32.totalorder %s137, %s138
    %p149 = scmp.eq.s32.totalorder %s19, 0
    %p150 = por %p148, %p149
    %p151 = scmp.ne.s32.totalorder %s137, %s138
    %p152 = scmp.eq.s32.totalorder %s20, 1
    %p153 = por %p151, %p152
    %p155 = scmp.ne.s32.totalorder %s138, %s154
    %p156 = scmp.eq.s32.totalorder %s20, 0
    %p157 = por %p155, %p156
    %s158 = ssub.s32 %s14, %s21
    %p159 = scmp.eq.s32.totalorder %s158, 0
    %s161 = sadd.s32 %s160, 1
    %s162 = scalar_select %p159, %s160, %s161
    %p165 = pneg %p159
    %p166 = scmp.eq.s32.totalorder %s14, 1
    %p167 = por %p165, %p166
    %p168 = scmp.ne.s32.totalorder %s160, %s163
    %p169 = scmp.eq.s32.totalorder %s14, 0
    %p170 = por %p168, %p169
    %p171 = scmp.ne.s32.totalorder %s160, %s163
    %p172 = scmp.eq.s32.totalorder %s19, 1
    %p173 = por %p171, %p172
    %p174 = scmp.ne.s32.totalorder %s163, %s164
    %p175 = scmp.eq.s32.totalorder %s19, 0
    %p176 = por %p174, %p175
    %p177 = scmp.ne.s32.totalorder %s163, %s164
    %p178 = scmp.eq.s32.totalorder %s20, 1
    %p179 = por %p177, %p178
    %p181 = scmp.ne.s32.totalorder %s164, %s180
    %p182 = scmp.eq.s32.totalorder %s20, 0
    %p183 = por %p181, %p182
    %s184 = ssub.s32 %s14, %s21
    %p185 = scmp.eq.s32.totalorder %s184, 0
    %s187 = sadd.s32 %s186, 1
    %s188 = scalar_select %p185, %s186, %s187
    %p191 = pneg %p185
    %p192 = scmp.eq.s32.totalorder %s14, 1
    %p193 = por %p191, %p192
    %p194 = scmp.ne.s32.totalorder %s186, %s189
    %p195 = scmp.eq.s32.totalorder %s14, 0
    %p196 = por %p194, %p195
    %p197 = scmp.ne.s32.totalorder %s186, %s189
    %p198 = scmp.eq.s32.totalorder %s19, 1
    %p199 = por %p197, %p198
    %p200 = scmp.ne.s32.totalorder %s189, %s190
    %p201 = scmp.eq.s32.totalorder %s19, 0
    %p202 = por %p200, %p201
    %p203 = scmp.ne.s32.totalorder %s189, %s190
    %p204 = scmp.eq.s32.totalorder %s20, 1
    %p205 = por %p203, %p204
    %p207 = scmp.ne.s32.totalorder %s190, %s206
    %p208 = scmp.eq.s32.totalorder %s20, 0
    %p209 = por %p207, %p208
    %p210 = scmp.le.s32.totalorder 1, %s14
    %p211 = scmp.lt.s32.totalorder %s14, 3
    %p212 = pnand %p210, %p211
    %p213 = pneg %p212
    // Predicated region
    $region9: #{conv_block_x2.3} parent=5 // pred_check
      _
    $region10: #{conv_block_x2.3} parent=5 // pred_check_branch
      %215 = sbr.rel (%p212) target = $region12
    $region11: #{conv_block_x2.3} parent=5 // pred_region
      %s216 = ssub.s32 %s14, 1
      // Predicated region
      $region13: #{conv_block_x2.3} parent=11 // pred_check
        %p217 = pneg %p61
      $region14: #{conv_block_x2.3} parent=11 // pred_check_branch
        %219 = sbr.rel (%p217) target = $region16
      $region15: #{conv_block_x2.3} parent=11 // pred_region
        _
      $region16: #{conv_block_x2.3} parent=11 // pred_fallthru
        _
      // Predicated region
      $region17: #{conv_block_x2.3} parent=11 // pred_check
        %p220 = pneg %p82
      $region18: #{conv_block_x2.3} parent=11 // pred_check_branch
        %222 = sbr.rel (%p220) target = $region20
      $region19: #{conv_block_x2.3} parent=11 // pred_region
        _
      $region20: #{conv_block_x2.3} parent=11 // pred_fallthru
        _
      // Predicated region
      $region21: #{conv_block_x2.3} parent=11 // pred_check
        %p223 = pneg %p103
      $region22: #{conv_block_x2.3} parent=11 // pred_check_branch
        %225 = sbr.rel (%p223) target = $region24
      $region23: #{conv_block_x2.3} parent=11 // pred_region
        _
      $region24: #{conv_block_x2.3} parent=11 // pred_fallthru
        _
      // Predicated region
      $region25: #{conv_block_x2.3} parent=11 // pred_check
        %p226 = pneg %p124
      $region26: #{conv_block_x2.3} parent=11 // pred_check_branch
        %228 = sbr.rel (%p226) target = $region28
      $region27: #{conv_block_x2.3} parent=11 // pred_region
        _
      $region28: #{conv_block_x2.3} parent=11 // pred_fallthru
        _
    $region12: #{conv_block_x2.3} parent=5 // pred_fallthru
      _
    %p229 = scmp.lt.s32.totalorder %s14, 2
    // Predicated region
    $region29: #{conv_block_x2.3} parent=5 // pred_check
      %p230 = pneg %p229
    $region30: #{conv_block_x2.3} parent=5 // pred_check_branch
      %232 = sbr.rel (%p230) target = $region32
    $region31: #{conv_block_x2.3} parent=5 // pred_region
      // Predicated region
      $region33: #{conv_block_x2.3} parent=31 // pred_check
        %p233 = pneg %p34
      $region34: #{conv_block_x2.3} parent=31 // pred_check_branch
        %235 = sbr.rel (%p233) target = $region36
      $region35: #{conv_block_x2.3} parent=31 // pred_region
        %p236 = scmp.lt.s32.totalorder %s14, 1
        %s237 = scalar_select %p236, %s14, 1
        %s238 = smul.addr %s237, 32
        %s239 = smul.addr %s238, 4
        %s240 = scalar_lea.vmem %s0, %s239
      $region36: #{conv_block_x2.3} parent=31 // pred_fallthru
        _
    $region32: #{conv_block_x2.3} parent=5 // pred_fallthru
      _
    %p241 = scmp.le.s32.totalorder 1, %s14
    %p242 = scmp.lt.s32.totalorder %s14, 3
    %p243 = pnand %p241, %p242
    %p244 = pneg %p243
    // Predicated region
    $region37: #{conv_block_x2.3} parent=5 // pred_check
      _
    $region38: #{conv_block_x2.3} parent=5 // pred_check_branch
      %246 = sbr.rel (%p243) target = $region40
    $region39: #{conv_block_x2.3} parent=5 // pred_region
      %s247 = ssub.s32 %s14, 1
      %p248 = scmp.lt.s32.totalorder %s19, 1
      %s249 = scalar_select %p248, %s19, 1
      %s250 = smul.addr %s249, 32
      %s251 = smul.addr %s250, 4
      %s252 = scalar_lea.vmem %s0, %s251
      %p253 = pneg %p40
      %p254 = pneg %p37
      %p255 = pneg %p61
      %p256 = pneg %p58
      %p257 = pneg %p82
      %p258 = pneg %p79
      %p259 = pneg %p103
      %p260 = pneg %p100
      %p261 = pneg %p124
      %p262 = pneg %p121
      %p263 = pneg %p150
      %p264 = pneg %p147
      %p265 = scmp.lt.s32.totalorder %s19, 1
      %s266 = scalar_select %p265, %s19, 1
      %s267 = smul.addr %s266, 32
      %s268 = smul.addr %s267, 4
      %s269 = scalar_lea.vmem %s5, %s268
      %p270 = pneg %p176
      %p271 = pneg %p173
      %p272 = scmp.lt.s32.totalorder %s19, 1
      %s273 = scalar_select %p272, %s19, 1
      %s274 = scalar_lea.vmem %s6, %s273
      %p275 = pneg %p202
      %p276 = pneg %p199
      %p277 = scmp.lt.s32.totalorder %s19, 1
      %s278 = scalar_select %p277, %s19, 1
      %s279 = scalar_lea.vmem %s7, %s278
      %p280 = scmp.lt.s32.totalorder %s19, 1
      %s281 = scalar_select %p280, %s19, 1
      %s282 = smul.addr %s281, 32
      %s283 = smul.addr %s282, 4
      %s284 = scalar_lea.vmem %s0, %s283
      %p285 = scmp.lt.s32.totalorder %s19, 1
      %s286 = scalar_select %p285, %s19, 1
      %s287 = smul.addr %s286, 32
      %s288 = smul.addr %s287, 4
      %s289 = scalar_lea.vmem %s5, %s288
      %p290 = scmp.lt.s32.totalorder %s19, 1
      %s291 = scalar_select %p290, %s19, 1
      %s292 = scalar_lea.vmem %s6, %s291
      %p293 = scmp.lt.s32.totalorder %s19, 1
      %s294 = scalar_select %p293, %s19, 1
      %s295 = scalar_lea.vmem %s7, %s294
      %v297 = vld [vmem:[%s284] sm:$0xf]
      %v298 = vld [vmem:[%s284 + $0x4] sm:$0xf]
      %v299 = vld [vmem:[%s284 + $0x8] sm:$0xf]
      %v300 = vld [vmem:[%s284 + $0xc] sm:$0xf]
      %v301 = vld [vmem:[%s284 + $0x10] sm:$0xf]
      %v302 = vld [vmem:[%s284 + $0x14] sm:$0xf]
      %v303 = vld [vmem:[%s284 + $0x18] sm:$0xf]
      %v304 = vld [vmem:[%s284 + $0x1c] sm:$0xf]
      %v305 = vld [vmem:[%s284 + $0x20] sm:$0xf]
      %v306 = vld [vmem:[%s284 + $0x24] sm:$0xf]
      %v307 = vld [vmem:[%s284 + $0x28] sm:$0xf]
      %v308 = vld [vmem:[%s284 + $0x2c] sm:$0xf]
      %v309 = vld [vmem:[%s284 + $0x30] sm:$0xf]
      %v310 = vld [vmem:[%s284 + $0x34] sm:$0xf]
      %v311 = vld [vmem:[%s284 + $0x38] sm:$0xf]
      %v312 = vld [vmem:[%s284 + $0x3c] sm:$0xf]
      %v313 = vld [vmem:[%s284 + $0x40] sm:$0xf]
      %v314 = vld [vmem:[%s284 + $0x44] sm:$0xf]
      %v315 = vld [vmem:[%s284 + $0x48] sm:$0xf]
      %v316 = vld [vmem:[%s284 + $0x4c] sm:$0xf]
      %v317 = vld [vmem:[%s284 + $0x50] sm:$0xf]
      %v318 = vld [vmem:[%s284 + $0x54] sm:$0xf]
      %v319 = vld [vmem:[%s284 + $0x58] sm:$0xf]
      %v320 = vld [vmem:[%s284 + $0x5c] sm:$0xf]
      %v321 = vld [vmem:[%s284 + $0x60] sm:$0xf]
      %v322 = vld [vmem:[%s284 + $0x64] sm:$0xf]
      %v323 = vld [vmem:[%s284 + $0x68] sm:$0xf]
      %v324 = vld [vmem:[%s284 + $0x6c] sm:$0xf]
      %v325 = vld [vmem:[%s284 + $0x70] sm:$0xf]
      %v326 = vld [vmem:[%s284 + $0x74] sm:$0xf]
      %v327 = vld [vmem:[%s284 + $0x78] sm:$0xf]
      %v328 = vld [vmem:[%s284 + $0x7c] sm:$0xf]
      %v329 = vld [vmem:[%s1] sm:$0x1]
      %v330 = vld [vmem:[%s2] sm:$0x1]
      %v331 = vunpack.c.l.bf16 %v297
      %v332 = vunpack.c.l.bf16 %v298
      %v333 = vunpack.c.l.bf16 %v299
      %v334 = vunpack.c.l.bf16 %v300
      %v335 = vunpack.c.l.bf16 %v301
      %v336 = vunpack.c.l.bf16 %v302
      %v337 = vunpack.c.l.bf16 %v303
      %v338 = vunpack.c.l.bf16 %v304
      %v339 = vunpack.c.l.bf16 %v305
      %v340 = vunpack.c.l.bf16 %v306
      %v341 = vunpack.c.l.bf16 %v307
      %v342 = vunpack.c.l.bf16 %v308
      %v343 = vunpack.c.l.bf16 %v309
      %v344 = vunpack.c.l.bf16 %v310
      %v345 = vunpack.c.l.bf16 %v311
      %v346 = vunpack.c.l.bf16 %v312
      %v347 = vunpack.c.l.bf16 %v313
      %v348 = vunpack.c.l.bf16 %v314
      %v349 = vunpack.c.l.bf16 %v315
      %v350 = vunpack.c.l.bf16 %v316
      %v351 = vunpack.c.l.bf16 %v317
      %v352 = vunpack.c.l.bf16 %v318
      %v353 = vunpack.c.l.bf16 %v319
      %v354 = vunpack.c.l.bf16 %v320
      %v355 = vunpack.c.l.bf16 %v321
      %v356 = vunpack.c.l.bf16 %v322
      %v357 = vunpack.c.l.bf16 %v323
      %v358 = vunpack.c.l.bf16 %v324
      %v359 = vunpack.c.l.bf16 %v325
      %v360 = vunpack.c.l.bf16 %v326
      %v361 = vunpack.c.l.bf16 %v327
      %v362 = vunpack.c.l.bf16 %v328
      %v364 = vperm.slane %v329, 0
      %v366 = vmul.f32 %v331, %v364
      %v367 = vmul.f32 %v332, %v364
      %v368 = vmul.f32 %v333, %v364
      %v369 = vmul.f32 %v334, %v364
      %v370 = vmul.f32 %v335, %v364
      %v371 = vmul.f32 %v336, %v364
      %v372 = vmul.f32 %v337, %v364
      %v373 = vmul.f32 %v338, %v364
      %v374 = vmul.f32 %v339, %v364
      %v375 = vmul.f32 %v340, %v364
      %v376 = vmul.f32 %v341, %v364
      %v377 = vmul.f32 %v342, %v364
      %v378 = vmul.f32 %v343, %v364
      %v379 = vmul.f32 %v344, %v364
      %v380 = vmul.f32 %v345, %v364
      %v381 = vmul.f32 %v346, %v364
      %v382 = vmul.f32 %v347, %v364
      %v383 = vmul.f32 %v348, %v364
      %v384 = vmul.f32 %v349, %v364
      %v385 = vmul.f32 %v350, %v364
      %v386 = vmul.f32 %v351, %v364
      %v387 = vmul.f32 %v352, %v364
      %v388 = vmul.f32 %v353, %v364
      %v389 = vmul.f32 %v354, %v364
      %v390 = vmul.f32 %v355, %v364
      %v391 = vmul.f32 %v356, %v364
      %v392 = vmul.f32 %v357, %v364
      %v393 = vmul.f32 %v358, %v364
      %v394 = vmul.f32 %v359, %v364
      %v395 = vmul.f32 %v360, %v364
      %v396 = vmul.f32 %v361, %v364
      %v397 = vmul.f32 %v362, %v364
      %v399 = vperm.slane %v330, 0
      %v401 = vadd.f32 %v366, %v399
      %v402 = vadd.f32 %v367, %v399
      %v403 = vadd.f32 %v368, %v399
      %v404 = vadd.f32 %v369, %v399
      %v405 = vadd.f32 %v370, %v399
      %v406 = vadd.f32 %v371, %v399
      %v407 = vadd.f32 %v372, %v399
      %v408 = vadd.f32 %v373, %v399
      %v409 = vadd.f32 %v374, %v399
      %v410 = vadd.f32 %v375, %v399
      %v411 = vadd.f32 %v376, %v399
      %v412 = vadd.f32 %v377, %v399
      %v413 = vadd.f32 %v378, %v399
      %v414 = vadd.f32 %v379, %v399
      %v415 = vadd.f32 %v380, %v399
      %v416 = vadd.f32 %v381, %v399
      %v417 = vadd.f32 %v382, %v399
      %v418 = vadd.f32 %v383, %v399
      %v419 = vadd.f32 %v384, %v399
      %v420 = vadd.f32 %v385, %v399
      %v421 = vadd.f32 %v386, %v399
      %v422 = vadd.f32 %v387, %v399
      %v423 = vadd.f32 %v388, %v399
      %v424 = vadd.f32 %v389, %v399
      %v425 = vadd.f32 %v390, %v399
      %v426 = vadd.f32 %v391, %v399
      %v427 = vadd.f32 %v392, %v399
      %v428 = vadd.f32 %v393, %v399
      %v429 = vadd.f32 %v394, %v399
      %v430 = vadd.f32 %v395, %v399
      %v431 = vadd.f32 %v396, %v399
      %v432 = vadd.f32 %v397, %v399
      %v433 = vmax.f32 %v401, 0.0
      %v434 = vmax.f32 %v402, 0.0
      %v435 = vmax.f32 %v403, 0.0
      %v436 = vmax.f32 %v404, 0.0
      %v437 = vmax.f32 %v405, 0.0
      %v438 = vmax.f32 %v406, 0.0
      %v439 = vmax.f32 %v407, 0.0
      %v440 = vmax.f32 %v408, 0.0
      %v441 = vmax.f32 %v409, 0.0
      %v442 = vmax.f32 %v410, 0.0
      %v443 = vmax.f32 %v411, 0.0
      %v444 = vmax.f32 %v412, 0.0
      %v445 = vmax.f32 %v413, 0.0
      %v446 = vmax.f32 %v414, 0.0
      %v447 = vmax.f32 %v415, 0.0
      %v448 = vmax.f32 %v416, 0.0
      %v449 = vmax.f32 %v417, 0.0
      %v450 = vmax.f32 %v418, 0.0
      %v451 = vmax.f32 %v419, 0.0
      %v452 = vmax.f32 %v420, 0.0
      %v453 = vmax.f32 %v421, 0.0
      %v454 = vmax.f32 %v422, 0.0
      %v455 = vmax.f32 %v423, 0.0
      %v456 = vmax.f32 %v424, 0.0
      %v457 = vmax.f32 %v425, 0.0
      %v458 = vmax.f32 %v426, 0.0
      %v459 = vmax.f32 %v427, 0.0
      %v460 = vmax.f32 %v428, 0.0
      %v461 = vmax.f32 %v429, 0.0
      %v462 = vmax.f32 %v430, 0.0
      %v463 = vmax.f32 %v431, 0.0
      %v464 = vmax.f32 %v432, 0.0
      %v465 = vpack.c.bf16 %v433, %v433
      %v466 = vpack.c.bf16 %v434, %v434
      %v467 = vpack.c.bf16 %v435, %v435
      %v468 = vpack.c.bf16 %v436, %v436
      %v469 = vpack.c.bf16 %v437, %v437
      %v470 = vpack.c.bf16 %v438, %v438
      %v471 = vpack.c.bf16 %v439, %v439
      %v472 = vpack.c.bf16 %v440, %v440
      %v473 = vpack.c.bf16 %v441, %v441
      %v474 = vpack.c.bf16 %v442, %v442
      %v475 = vpack.c.bf16 %v443, %v443
      %v476 = vpack.c.bf16 %v444, %v444
      %v477 = vpack.c.bf16 %v445, %v445
      %v478 = vpack.c.bf16 %v446, %v446
      %v479 = vpack.c.bf16 %v447, %v447
      %v480 = vpack.c.bf16 %v448, %v448
      %v481 = vpack.c.bf16 %v449, %v449
      %v482 = vpack.c.bf16 %v450, %v450
      %v483 = vpack.c.bf16 %v451, %v451
      %v484 = vpack.c.bf16 %v452, %v452
      %v485 = vpack.c.bf16 %v453, %v453
      %v486 = vpack.c.bf16 %v454, %v454
      %v487 = vpack.c.bf16 %v455, %v455
      %v488 = vpack.c.bf16 %v456, %v456
      %v489 = vpack.c.bf16 %v457, %v457
      %v490 = vpack.c.bf16 %v458, %v458
      %v491 = vpack.c.bf16 %v459, %v459
      %v492 = vpack.c.bf16 %v460, %v460
      %v493 = vpack.c.bf16 %v461, %v461
      %v494 = vpack.c.bf16 %v462, %v462
      %v495 = vpack.c.bf16 %v463, %v463
      %v496 = vpack.c.bf16 %v464, %v464
      %v529 = vunpack.c.l.b16 %v465
      %v530 = vunpack.c.l.b16 %v466
      %v531 = vunpack.c.l.b16 %v467
      %v532 = vunpack.c.l.b16 %v468
      %v533 = vunpack.c.l.b16 %v469
      %v534 = vunpack.c.l.b16 %v470
      %v535 = vunpack.c.l.b16 %v471
      %v536 = vunpack.c.l.b16 %v472
      %v537 = vunpack.c.l.b16 %v473
      %v538 = vunpack.c.l.b16 %v474
      %v539 = vunpack.c.l.b16 %v475
      %v540 = vunpack.c.l.b16 %v476
      %v541 = vunpack.c.l.b16 %v477
      %v542 = vunpack.c.l.b16 %v478
      %v543 = vunpack.c.l.b16 %v479
      %v544 = vunpack.c.l.b16 %v480
      %v545 = vunpack.c.l.b16 %v481
      %v546 = vunpack.c.l.b16 %v482
      %v547 = vunpack.c.l.b16 %v483
      %v548 = vunpack.c.l.b16 %v484
      %v549 = vunpack.c.l.b16 %v485
      %v550 = vunpack.c.l.b16 %v486
      %v551 = vunpack.c.l.b16 %v487
      %v552 = vunpack.c.l.b16 %v488
      %v553 = vunpack.c.l.b16 %v489
      %v554 = vunpack.c.l.b16 %v490
      %v555 = vunpack.c.l.b16 %v491
      %v556 = vunpack.c.l.b16 %v492
      %v557 = vunpack.c.l.b16 %v493
      %v558 = vunpack.c.l.b16 %v494
      %v559 = vunpack.c.l.b16 %v495
      %v560 = vunpack.c.l.b16 %v496
      %v561 = vpack.c.b16 %v530, %v529
      %v562 = vpack.c.b16 %v532, %v531
      %v563 = vpack.c.b16 %v534, %v533
      %v564 = vpack.c.b16 %v536, %v535
      %v565 = vpack.c.b16 %v538, %v537
      %v566 = vpack.c.b16 %v540, %v539
      %v567 = vpack.c.b16 %v542, %v541
      %v568 = vpack.c.b16 %v544, %v543
      %v569 = vpack.c.b16 %v546, %v545
      %v570 = vpack.c.b16 %v548, %v547
      %v571 = vpack.c.b16 %v550, %v549
      %v572 = vpack.c.b16 %v552, %v551
      %v573 = vpack.c.b16 %v554, %v553
      %v574 = vpack.c.b16 %v556, %v555
      %v575 = vpack.c.b16 %v558, %v557
      %v576 = vpack.c.b16 %v560, %v559
      %v578 = vshrl.u32 %v561, 16
      %v580 = vrot.slane %v578, 7
      %v581 = vshll.u32 %v561, 16
      %v583 = vor.u32 %v580, %v581
      %v585 = vshrl.u32 %v562, 16
      %v587 = vrot.slane %v585, 7
      %v588 = vshll.u32 %v562, 16
      %v590 = vor.u32 %v587, %v588
      %v592 = vshrl.u32 %v563, 16
      %v594 = vrot.slane %v592, 7
      %v595 = vshll.u32 %v563, 16
      %v597 = vor.u32 %v594, %v595
      %v599 = vshrl.u32 %v564, 16
      %v601 = vrot.slane %v599, 7
      %v602 = vshll.u32 %v564, 16
      %v604 = vor.u32 %v601, %v602
      %v606 = vshrl.u32 %v565, 16
      %v608 = vrot.slane %v606, 7
      %v609 = vshll.u32 %v565, 16
      %v611 = vor.u32 %v608, %v609
      %v613 = vshrl.u32 %v566, 16
      %v615 = vrot.slane %v613, 7
      %v616 = vshll.u32 %v566, 16
      %v618 = vor.u32 %v615, %v616
      %v620 = vshrl.u32 %v567, 16
      %v622 = vrot.slane %v620, 7
      %v623 = vshll.u32 %v567, 16
      %v625 = vor.u32 %v622, %v623
      %v627 = vshrl.u32 %v568, 16
      %v629 = vrot.slane %v627, 7
      %v630 = vshll.u32 %v568, 16
      %v632 = vor.u32 %v629, %v630
      %v634 = vshrl.u32 %v569, 16
      %v636 = vrot.slane %v634, 7
      %v637 = vshll.u32 %v569, 16
      %v639 = vor.u32 %v636, %v637
      %v641 = vshrl.u32 %v570, 16
      %v643 = vrot.slane %v641, 7
      %v644 = vshll.u32 %v570, 16
      %v646 = vor.u32 %v643, %v644
      %v648 = vshrl.u32 %v571, 16
      %v650 = vrot.slane %v648, 7
      %v651 = vshll.u32 %v571, 16
      %v653 = vor.u32 %v650, %v651
      %v655 = vshrl.u32 %v572, 16
      %v657 = vrot.slane %v655, 7
      %v658 = vshll.u32 %v572, 16
      %v660 = vor.u32 %v657, %v658
      %v662 = vshrl.u32 %v573, 16
      %v664 = vrot.slane %v662, 7
      %v665 = vshll.u32 %v573, 16
      %v667 = vor.u32 %v664, %v665
      %v669 = vshrl.u32 %v574, 16
      %v671 = vrot.slane %v669, 7
      %v672 = vshll.u32 %v574, 16
      %v674 = vor.u32 %v671, %v672
      %v676 = vshrl.u32 %v575, 16
      %v678 = vrot.slane %v676, 7
      %v679 = vshll.u32 %v575, 16
      %v681 = vor.u32 %v678, %v679
      %v683 = vshrl.u32 %v576, 16
      %v685 = vrot.slane %v683, 7
      %v686 = vshll.u32 %v576, 16
      %v688 = vor.u32 %v685, %v686
      %vm705 = vcmask 1040384
      %vm706 = vsmask.f32 256
      %vm707 = vmand %vm705, %vm706
      %v708 = vsel %vm707, 0, %v583
      %v709 = vsel %vm707, 0, %v590
      %v710 = vsel %vm707, 0, %v597
      %v711 = vsel %vm707, 0, %v604
      %v712 = vsel %vm707, 0, %v611
      %v713 = vsel %vm707, 0, %v618
      %v714 = vsel %vm707, 0, %v625
      %v715 = vsel %vm707, 0, %v632
      %v716 = vsel %vm707, 0, %v639
      %v717 = vsel %vm707, 0, %v646
      %v718 = vsel %vm707, 0, %v653
      %v719 = vsel %vm707, 0, %v660
      %v720 = vsel %vm707, 0, %v667
      %v721 = vsel %vm707, 0, %v674
      %v722 = vsel %vm707, 0, %v681
      %v723 = vsel %vm707, 0, %v688
      %v724 = vrot.slane %v581, 1
      %v725 = vor.u32 %v578, %v724
      %v726 = vrot.slane %v588, 1
      %v727 = vor.u32 %v585, %v726
      %v728 = vrot.slane %v595, 1
      %v729 = vor.u32 %v592, %v728
      %v730 = vrot.slane %v602, 1
      %v731 = vor.u32 %v599, %v730
      %v732 = vrot.slane %v609, 1
      %v733 = vor.u32 %v606, %v732
      %v734 = vrot.slane %v616, 1
      %v735 = vor.u32 %v613, %v734
      %v736 = vrot.slane %v623, 1
      %v737 = vor.u32 %v620, %v736
      %v738 = vrot.slane %v630, 1
      %v739 = vor.u32 %v627, %v738
      %v740 = vrot.slane %v637, 1
      %v741 = vor.u32 %v634, %v740
      %v742 = vrot.slane %v644, 1
      %v743 = vor.u32 %v641, %v742
      %v744 = vrot.slane %v651, 1
      %v745 = vor.u32 %v648, %v744
      %v746 = vrot.slane %v658, 1
      %v747 = vor.u32 %v655, %v746
      %v748 = vrot.slane %v665, 1
      %v749 = vor.u32 %v662, %v748
      %v750 = vrot.slane %v672, 1
      %v751 = vor.u32 %v669, %v750
      %v752 = vrot.slane %v679, 1
      %v753 = vor.u32 %v676, %v752
      %v754 = vrot.slane %v686, 1
      %v755 = vor.u32 %v683, %v754
      %vm772 = vcmask 1047552
      %vm773 = vsmask.f32 7424
      %vm774 = vmand %vm772, %vm773
      %v775 = vsel %vm774, %v725, 0
      %v776 = vsel %vm774, %v727, 0
      %v777 = vsel %vm774, %v729, 0
      %v778 = vsel %vm774, %v731, 0
      %v779 = vsel %vm774, %v733, 0
      %v780 = vsel %vm774, %v735, 0
      %v781 = vsel %vm774, %v737, 0
      %v782 = vsel %vm774, %v739, 0
      %v783 = vsel %vm774, %v741, 0
      %v784 = vsel %vm774, %v743, 0
      %v785 = vsel %vm774, %v745, 0
      %v786 = vsel %vm774, %v747, 0
      %v787 = vsel %vm774, %v749, 0
      %v788 = vsel %vm774, %v751, 0
      %v789 = vsel %vm774, %v753, 0
      %v790 = vsel %vm774, %v755, 0
      %791 = vrot.lane.b32.xlu0 %v561, 8
      %v792 = vpop.permute.xlu0 %791
      %793 = vrot.lane.b32.xlu0 %v562, 8
      %v794 = vpop.permute.xlu0 %793
      %795 = vrot.lane.b32.xlu0 %v563, 8
      %v796 = vpop.permute.xlu0 %795
      %797 = vrot.lane.b32.xlu0 %v564, 8
      %v798 = vpop.permute.xlu0 %797
      %799 = vrot.lane.b32.xlu0 %v565, 8
      %v800 = vpop.permute.xlu0 %799
      %801 = vrot.lane.b32.xlu0 %v566, 8
      %v802 = vpop.permute.xlu0 %801
      %803 = vrot.lane.b32.xlu0 %v567, 8
      %v804 = vpop.permute.xlu0 %803
      %805 = vrot.lane.b32.xlu0 %v568, 8
      %v806 = vpop.permute.xlu0 %805
      %807 = vrot.lane.b32.xlu0 %v569, 8
      %v808 = vpop.permute.xlu0 %807
      %809 = vrot.lane.b32.xlu0 %v570, 8
      %v810 = vpop.permute.xlu0 %809
      %811 = vrot.lane.b32.xlu0 %v571, 8
      %v812 = vpop.permute.xlu0 %811
      %813 = vrot.lane.b32.xlu0 %v572, 8
      %v814 = vpop.permute.xlu0 %813
      %815 = vrot.lane.b32.xlu0 %v573, 8
      %v816 = vpop.permute.xlu0 %815
      %817 = vrot.lane.b32.xlu0 %v574, 8
      %v818 = vpop.permute.xlu0 %817
      %819 = vrot.lane.b32.xlu0 %v575, 8
      %v820 = vpop.permute.xlu0 %819
      %821 = vrot.lane.b32.xlu0 %v576, 8
      %v822 = vpop.permute.xlu0 %821
      %839 = vrot.lane.b32.xlu0 %v775, 16
      %v840 = vpop.permute.xlu0 %839
      %841 = vrot.lane.b32.xlu0 %v776, 16
      %v842 = vpop.permute.xlu0 %841
      %843 = vrot.lane.b32.xlu0 %v777, 16
      %v844 = vpop.permute.xlu0 %843
      %845 = vrot.lane.b32.xlu0 %v778, 16
      %v846 = vpop.permute.xlu0 %845
      %847 = vrot.lane.b32.xlu0 %v779, 16
      %v848 = vpop.permute.xlu0 %847
      %849 = vrot.lane.b32.xlu0 %v780, 16
      %v850 = vpop.permute.xlu0 %849
      %851 = vrot.lane.b32.xlu0 %v781, 16
      %v852 = vpop.permute.xlu0 %851
      %853 = vrot.lane.b32.xlu0 %v782, 16
      %v854 = vpop.permute.xlu0 %853
      %855 = vrot.lane.b32.xlu0 %v783, 16
      %v856 = vpop.permute.xlu0 %855
      %857 = vrot.lane.b32.xlu0 %v784, 16
      %v858 = vpop.permute.xlu0 %857
      %859 = vrot.lane.b32.xlu0 %v785, 16
      %v860 = vpop.permute.xlu0 %859
      %861 = vrot.lane.b32.xlu0 %v786, 16
      %v862 = vpop.permute.xlu0 %861
      %863 = vrot.lane.b32.xlu0 %v787, 16
      %v864 = vpop.permute.xlu0 %863
      %865 = vrot.lane.b32.xlu0 %v788, 16
      %v866 = vpop.permute.xlu0 %865
      %867 = vrot.lane.b32.xlu0 %v789, 16
      %v868 = vpop.permute.xlu0 %867
      %869 = vrot.lane.b32.xlu0 %v790, 16
      %v870 = vpop.permute.xlu0 %869
      %vm871 = vcmask 64512
      %v874 = vsel %vm871, %v708, %v792
      %v877 = vsel %vm871, %v709, %v794
      %v880 = vsel %vm871, %v710, %v796
      %v883 = vsel %vm871, %v711, %v798
      %v886 = vsel %vm871, %v712, %v800
      %v889 = vsel %vm871, %v713, %v802
      %v892 = vsel %vm871, %v714, %v804
      %v895 = vsel %vm871, %v715, %v806
      %v898 = vsel %vm871, %v716, %v808
      %v901 = vsel %vm871, %v717, %v810
      %v904 = vsel %vm871, %v718, %v812
      %v907 = vsel %vm871, %v719, %v814
      %v910 = vsel %vm871, %v720, %v816
      %v913 = vsel %vm871, %v721, %v818
      %v916 = vsel %vm871, %v722, %v820
      %v919 = vsel %vm871, %v723, %v822
      %vm920 = vcmask 130048
      %v922 = vsel %vm920, %v874, %v840
      %v924 = vsel %vm920, %v877, %v842
      %v926 = vsel %vm920, %v880, %v844
      %v928 = vsel %vm920, %v883, %v846
      %v930 = vsel %vm920, %v886, %v848
      %v932 = vsel %vm920, %v889, %v850
      %v934 = vsel %vm920, %v892, %v852
      %v936 = vsel %vm920, %v895, %v854
      %v938 = vsel %vm920, %v898, %v856
      %v940 = vsel %vm920, %v901, %v858
      %v942 = vsel %vm920, %v904, %v860
      %v944 = vsel %vm920, %v907, %v862
      %v946 = vsel %vm920, %v910, %v864
      %v948 = vsel %vm920, %v913, %v866
      %v950 = vsel %vm920, %v916, %v868
      %v952 = vsel %vm920, %v919, %v870
      %969 = vrot.lane.b32.xlu0 %v922, 24
      %v970 = vpop.permute.xlu0 %969
      %971 = vrot.lane.b32.xlu0 %v924, 24
      %v972 = vpop.permute.xlu0 %971
      %973 = vrot.lane.b32.xlu0 %v926, 24
      %v974 = vpop.permute.xlu0 %973
      %975 = vrot.lane.b32.xlu0 %v928, 24
      %v976 = vpop.permute.xlu0 %975
      %977 = vrot.lane.b32.xlu0 %v930, 24
      %v978 = vpop.permute.xlu0 %977
      %979 = vrot.lane.b32.xlu0 %v932, 24
      %v980 = vpop.permute.xlu0 %979
      %981 = vrot.lane.b32.xlu0 %v934, 24
      %v982 = vpop.permute.xlu0 %981
      %983 = vrot.lane.b32.xlu0 %v936, 24
      %v984 = vpop.permute.xlu0 %983
      %985 = vrot.lane.b32.xlu0 %v938, 24
      %v986 = vpop.permute.xlu0 %985
      %987 = vrot.lane.b32.xlu0 %v940, 24
      %v988 = vpop.permute.xlu0 %987
      %989 = vrot.lane.b32.xlu0 %v942, 24
      %v990 = vpop.permute.xlu0 %989
      %991 = vrot.lane.b32.xlu0 %v944, 24
      %v992 = vpop.permute.xlu0 %991
      %993 = vrot.lane.b32.xlu0 %v946, 24
      %v994 = vpop.permute.xlu0 %993
      %995 = vrot.lane.b32.xlu0 %v948, 24
      %v996 = vpop.permute.xlu0 %995
      %997 = vrot.lane.b32.xlu0 %v950, 24
      %v998 = vpop.permute.xlu0 %997
      %999 = vrot.lane.b32.xlu0 %v952, 24
      %v1000 = vpop.permute.xlu0 %999
      %1002 = vrot.lane.b32.xlu0 %v924, 48
      %v1003 = vpop.permute.xlu0 %1002
      %1004 = vrot.lane.b32.xlu0 %v926, 48
      %v1005 = vpop.permute.xlu0 %1004
      %1006 = vrot.lane.b32.xlu0 %v928, 48
      %v1007 = vpop.permute.xlu0 %1006
      %1008 = vrot.lane.b32.xlu0 %v930, 48
      %v1009 = vpop.permute.xlu0 %1008
      %1010 = vrot.lane.b32.xlu0 %v932, 48
      %v1011 = vpop.permute.xlu0 %1010
      %1012 = vrot.lane.b32.xlu0 %v934, 48
      %v1013 = vpop.permute.xlu0 %1012
      %1014 = vrot.lane.b32.xlu0 %v936, 48
      %v1015 = vpop.permute.xlu0 %1014
      %1016 = vrot.lane.b32.xlu0 %v938, 48
      %v1017 = vpop.permute.xlu0 %1016
      %1018 = vrot.lane.b32.xlu0 %v940, 48
      %v1019 = vpop.permute.xlu0 %1018
      %1020 = vrot.lane.b32.xlu0 %v942, 48
      %v1021 = vpop.permute.xlu0 %1020
      %1022 = vrot.lane.b32.xlu0 %v944, 48
      %v1023 = vpop.permute.xlu0 %1022
      %1024 = vrot.lane.b32.xlu0 %v946, 48
      %v1025 = vpop.permute.xlu0 %1024
      %1026 = vrot.lane.b32.xlu0 %v948, 48
      %v1027 = vpop.permute.xlu0 %1026
      %1028 = vrot.lane.b32.xlu0 %v950, 48
      %v1029 = vpop.permute.xlu0 %1028
      %1030 = vrot.lane.b32.xlu0 %v952, 48
      %v1031 = vpop.permute.xlu0 %1030
      %1032 = vrot.lane.b32.xlu0 0, 48
      %v1033 = vpop.permute.xlu0 %1032
      %vm1034 = vcmask 195584
      %v1037 = vsel %vm1034, 0, %v970
      %v1039 = vsel %vm1034, %v922, %v972
      %v1041 = vsel %vm1034, %v924, %v974
      %v1043 = vsel %vm1034, %v926, %v976
      %v1045 = vsel %vm1034, %v928, %v978
      %v1047 = vsel %vm1034, %v930, %v980
      %v1049 = vsel %vm1034, %v932, %v982
      %v1051 = vsel %vm1034, %v934, %v984
      %v1053 = vsel %vm1034, %v936, %v986
      %v1055 = vsel %vm1034, %v938, %v988
      %v1057 = vsel %vm1034, %v940, %v990
      %v1059 = vsel %vm1034, %v942, %v992
      %v1061 = vsel %vm1034, %v944, %v994
      %v1063 = vsel %vm1034, %v946, %v996
      %v1065 = vsel %vm1034, %v948, %v998
      %v1067 = vsel %vm1034, %v950, %v1000
      %vm1068 = vcmask 392192
      %v1070 = vsel %vm1068, %v1037, %v1003
      %v1072 = vsel %vm1068, %v1039, %v1005
      %v1074 = vsel %vm1068, %v1041, %v1007
      %v1076 = vsel %vm1068, %v1043, %v1009
      %v1078 = vsel %vm1068, %v1045, %v1011
      %v1080 = vsel %vm1068, %v1047, %v1013
      %v1082 = vsel %vm1068, %v1049, %v1015
      %v1084 = vsel %vm1068, %v1051, %v1017
      %v1086 = vsel %vm1068, %v1053, %v1019
      %v1088 = vsel %vm1068, %v1055, %v1021
      %v1090 = vsel %vm1068, %v1057, %v1023
      %v1092 = vsel %vm1068, %v1059, %v1025
      %v1094 = vsel %vm1068, %v1061, %v1027
      %v1096 = vsel %vm1068, %v1063, %v1029
      %v1098 = vsel %vm1068, %v1065, %v1031
      %v1100 = vsel %vm1068, %v1067, %v1033
      %v1101 = vld [vmem:[%s3] sm:$0xf]
      %v1102 = vld [vmem:[%s3 + $0x4] sm:$0xf]
      %v1103 = vld [vmem:[%s3 + $0x8] sm:$0xf]
      %v1104 = vld [vmem:[%s3 + $0xc] sm:$0xf]
      %v1105 = vld [vmem:[%s3 + $0x10] sm:$0xf]
      %v1106 = vld [vmem:[%s3 + $0x14] sm:$0xf]
      %v1107 = vld [vmem:[%s3 + $0x18] sm:$0xf]
      %v1108 = vld [vmem:[%s3 + $0x1c] sm:$0xf]
      %v1109 = vld [vmem:[%s3 + $0x20] sm:$0xf]
      %v1110 = vld [vmem:[%s4] sm:$0x1]
      %v1112 = vperm.slane %v1110, 0
      %v1123 = vunpack.c.l.b16 %v1101
      %v1124 = vunpack.c.l.b16 %v1102
      %v1125 = vunpack.c.l.b16 %v1103
      %v1126 = vunpack.c.l.b16 %v1104
      %v1127 = vunpack.c.l.b16 %v1105
      %v1128 = vunpack.c.l.b16 %v1106
      %v1129 = vunpack.c.l.b16 %v1107
      %v1130 = vunpack.c.l.b16 %v1108
      %v1131 = vunpack.c.l.b16 %v1109
      %v1132 = vpack.c.b16 %v1124, %v1123
      %v1133 = vpack.c.b16 %v1126, %v1125
      %v1134 = vpack.c.b16 %v1128, %v1127
      %v1135 = vpack.c.b16 %v1130, %v1129
      %v1136 = vpack.c.b16 %v1131, %v1131
      %vm1141 = vcmask 588800
      %v1142 = vsel %vm1141, %v1070, 0
      %v1144 = vsel %vm1141, %v1072, 0
      %v1146 = vsel %vm1141, %v1074, 0
      %v1148 = vsel %vm1141, %v1076, 0
      %v1150 = vsel %vm1141, %v1078, 0
      %v1152 = vsel %vm1141, %v1080, 0
      %v1154 = vsel %vm1141, %v1082, 0
      %v1156 = vsel %vm1141, %v1084, 0
      %v1158 = vsel %vm1141, %v1086, 0
      %v1160 = vsel %vm1141, %v1088, 0
      %v1162 = vsel %vm1141, %v1090, 0
      %v1164 = vsel %vm1141, %v1092, 0
      %v1166 = vsel %vm1141, %v1094, 0
      %v1168 = vsel %vm1141, %v1096, 0
      %v1170 = vsel %vm1141, %v1098, 0
      %v1172 = vsel %vm1141, %v1100, 0
      %vm1174 = vcmask 1043456
      %v1176 = vsel %vm1174, %v1136, 0
      %1178 = vmatpush.bf16.msra.mxu0 0
      %1179 = vmatpush.bf16.msra.mxu0 0
      %1180 = vmatpush.bf16.msra.mxu0 0
      %1181 = vmatpush.bf16.msra.mxu0 %v1176
      %1182 = vmatpush.bf16.msra.mxu0 %v1135
      %1183 = vmatpush.bf16.msra.mxu0 %v1134
      %1184 = vmatpush.bf16.msra.mxu0 %v1133
      %1185 = vmatpush.bf16.msra.mxu0 %v1132
      %1186 = vmatmul.bf16.gmra.mxu0 %v1142
      %v1187 = vpop.f32.mrf.mxu0
      %v1188 = vadd.f32 %v1112, %v1187
      %v1189 = vpop.f32.mrf.mxu0
      %v1190 = vadd.f32 %v1112, %v1189
      %1191 = vmatmul.bf16.gmra.mxu0 %v1144
      %v1192 = vpop.f32.mrf.mxu0
      %v1193 = vadd.f32 %v1112, %v1192
      %v1194 = vpop.f32.mrf.mxu0
      %v1195 = vadd.f32 %v1112, %v1194
      %1196 = vmatmul.bf16.gmra.mxu0 %v1146
      %v1197 = vpop.f32.mrf.mxu0
      %v1198 = vadd.f32 %v1112, %v1197
      %v1199 = vpop.f32.mrf.mxu0
      %v1200 = vadd.f32 %v1112, %v1199
      %1201 = vmatmul.bf16.gmra.mxu0 %v1148
      %v1202 = vpop.f32.mrf.mxu0
      %v1203 = vadd.f32 %v1112, %v1202
      %v1204 = vpop.f32.mrf.mxu0
      %v1205 = vadd.f32 %v1112, %v1204
      %1206 = vmatmul.bf16.gmra.mxu0 %v1150
      %v1207 = vpop.f32.mrf.mxu0
      %v1208 = vadd.f32 %v1112, %v1207
      %v1209 = vpop.f32.mrf.mxu0
      %v1210 = vadd.f32 %v1112, %v1209
      %1211 = vmatmul.bf16.gmra.mxu0 %v1152
      %v1212 = vpop.f32.mrf.mxu0
      %v1213 = vadd.f32 %v1112, %v1212
      %v1214 = vpop.f32.mrf.mxu0
      %v1215 = vadd.f32 %v1112, %v1214
      %1216 = vmatmul.bf16.gmra.mxu0 %v1154
      %v1217 = vpop.f32.mrf.mxu0
      %v1218 = vadd.f32 %v1112, %v1217
      %v1219 = vpop.f32.mrf.mxu0
      %v1220 = vadd.f32 %v1112, %v1219
      %1221 = vmatmul.bf16.gmra.mxu0 %v1156
      %v1222 = vpop.f32.mrf.mxu0
      %v1223 = vadd.f32 %v1112, %v1222
      %v1224 = vpop.f32.mrf.mxu0
      %v1225 = vadd.f32 %v1112, %v1224
      %1226 = vmatmul.bf16.gmra.mxu0 %v1158
      %v1227 = vpop.f32.mrf.mxu0
      %v1228 = vadd.f32 %v1112, %v1227
      %v1229 = vpop.f32.mrf.mxu0
      %v1230 = vadd.f32 %v1112, %v1229
      %1231 = vmatmul.bf16.gmra.mxu0 %v1160
      %v1232 = vpop.f32.mrf.mxu0
      %v1233 = vadd.f32 %v1112, %v1232
      %v1234 = vpop.f32.mrf.mxu0
      %v1235 = vadd.f32 %v1112, %v1234
      %1236 = vmatmul.bf16.gmra.mxu0 %v1162
      %v1237 = vpop.f32.mrf.mxu0
      %v1238 = vadd.f32 %v1112, %v1237
      %v1239 = vpop.f32.mrf.mxu0
      %v1240 = vadd.f32 %v1112, %v1239
      %1241 = vmatmul.bf16.gmra.mxu0 %v1164
      %v1242 = vpop.f32.mrf.mxu0
      %v1243 = vadd.f32 %v1112, %v1242
      %v1244 = vpop.f32.mrf.mxu0
      %v1245 = vadd.f32 %v1112, %v1244
      %1246 = vmatmul.bf16.gmra.mxu0 %v1166
      %v1247 = vpop.f32.mrf.mxu0
      %v1248 = vadd.f32 %v1112, %v1247
      %v1249 = vpop.f32.mrf.mxu0
      %v1250 = vadd.f32 %v1112, %v1249
      %1251 = vmatmul.bf16.gmra.mxu0 %v1168
      %v1252 = vpop.f32.mrf.mxu0
      %v1253 = vadd.f32 %v1112, %v1252
      %v1254 = vpop.f32.mrf.mxu0
      %v1255 = vadd.f32 %v1112, %v1254
      %1256 = vmatmul.bf16.gmra.mxu0 %v1170
      %v1257 = vpop.f32.mrf.mxu0
      %v1258 = vadd.f32 %v1112, %v1257
      %v1259 = vpop.f32.mrf.mxu0
      %v1260 = vadd.f32 %v1112, %v1259
      %1261 = vmatmul.bf16.gmra.mxu0 %v1172
      %v1262 = vpop.f32.mrf.mxu0
      %v1263 = vadd.f32 %v1112, %v1262
      %v1264 = vpop.f32.mrf.mxu0
      %v1265 = vadd.f32 %v1112, %v1264
      %1266 = vdwg.mxu0
      %v1267 = vpack.c.bf16 %v1188, %v1188
      %v1268 = vpack.c.bf16 %v1190, %v1190
      %v1269 = vpack.c.bf16 %v1193, %v1193
      %v1270 = vpack.c.bf16 %v1195, %v1195
      %v1271 = vpack.c.bf16 %v1198, %v1198
      %v1272 = vpack.c.bf16 %v1200, %v1200
      %v1273 = vpack.c.bf16 %v1203, %v1203
      %v1274 = vpack.c.bf16 %v1205, %v1205
      %v1275 = vpack.c.bf16 %v1208, %v1208
      %v1276 = vpack.c.bf16 %v1210, %v1210
      %v1277 = vpack.c.bf16 %v1213, %v1213
      %v1278 = vpack.c.bf16 %v1215, %v1215
      %v1279 = vpack.c.bf16 %v1218, %v1218
      %v1280 = vpack.c.bf16 %v1220, %v1220
      %v1281 = vpack.c.bf16 %v1223, %v1223
      %v1282 = vpack.c.bf16 %v1225, %v1225
      %v1283 = vpack.c.bf16 %v1228, %v1228
      %v1284 = vpack.c.bf16 %v1230, %v1230
      %v1285 = vpack.c.bf16 %v1233, %v1233
      %v1286 = vpack.c.bf16 %v1235, %v1235
      %v1287 = vpack.c.bf16 %v1238, %v1238
      %v1288 = vpack.c.bf16 %v1240, %v1240
      %v1289 = vpack.c.bf16 %v1243, %v1243
      %v1290 = vpack.c.bf16 %v1245, %v1245
      %v1291 = vpack.c.bf16 %v1248, %v1248
      %v1292 = vpack.c.bf16 %v1250, %v1250
      %v1293 = vpack.c.bf16 %v1253, %v1253
      %v1294 = vpack.c.bf16 %v1255, %v1255
      %v1295 = vpack.c.bf16 %v1258, %v1258
      %v1296 = vpack.c.bf16 %v1260, %v1260
      %v1297 = vpack.c.bf16 %v1263, %v1263
      %v1298 = vpack.c.bf16 %v1265, %v1265
      %vm1299 = vcmask 60416
      %1300 = vst.msk [vmem:[%s289] sm:$0xf] %vm1299, %v1267
      %1301 = vst.msk [vmem:[%s289 + $0x4] sm:$0xf] %vm1299, %v1268
      %1302 = vst.msk [vmem:[%s289 + $0x8] sm:$0xf] %vm1299, %v1269
      %1303 = vst.msk [vmem:[%s289 + $0xc] sm:$0xf] %vm1299, %v1270
      %1304 = vst.msk [vmem:[%s289 + $0x10] sm:$0xf] %vm1299, %v1271
      %1305 = vst.msk [vmem:[%s289 + $0x14] sm:$0xf] %vm1299, %v1272
      %1306 = vst.msk [vmem:[%s289 + $0x18] sm:$0xf] %vm1299, %v1273
      %1307 = vst.msk [vmem:[%s289 + $0x1c] sm:$0xf] %vm1299, %v1274
      %1308 = vst.msk [vmem:[%s289 + $0x20] sm:$0xf] %vm1299, %v1275
      %1309 = vst.msk [vmem:[%s289 + $0x24] sm:$0xf] %vm1299, %v1276
      %1310 = vst.msk [vmem:[%s289 + $0x28] sm:$0xf] %vm1299, %v1277
      %1311 = vst.msk [vmem:[%s289 + $0x2c] sm:$0xf] %vm1299, %v1278
      %1312 = vst.msk [vmem:[%s289 + $0x30] sm:$0xf] %vm1299, %v1279
      %1313 = vst.msk [vmem:[%s289 + $0x34] sm:$0xf] %vm1299, %v1280
      %1314 = vst.msk [vmem:[%s289 + $0x38] sm:$0xf] %vm1299, %v1281
      %1315 = vst.msk [vmem:[%s289 + $0x3c] sm:$0xf] %vm1299, %v1282
      %1316 = vst.msk [vmem:[%s289 + $0x40] sm:$0xf] %vm1299, %v1283
      %1317 = vst.msk [vmem:[%s289 + $0x44] sm:$0xf] %vm1299, %v1284
      %1318 = vst.msk [vmem:[%s289 + $0x48] sm:$0xf] %vm1299, %v1285
      %1319 = vst.msk [vmem:[%s289 + $0x4c] sm:$0xf] %vm1299, %v1286
      %1320 = vst.msk [vmem:[%s289 + $0x50] sm:$0xf] %vm1299, %v1287
      %1321 = vst.msk [vmem:[%s289 + $0x54] sm:$0xf] %vm1299, %v1288
      %1322 = vst.msk [vmem:[%s289 + $0x58] sm:$0xf] %vm1299, %v1289
      %1323 = vst.msk [vmem:[%s289 + $0x5c] sm:$0xf] %vm1299, %v1290
      %1324 = vst.msk [vmem:[%s289 + $0x60] sm:$0xf] %vm1299, %v1291
      %1325 = vst.msk [vmem:[%s289 + $0x64] sm:$0xf] %vm1299, %v1292
      %1326 = vst.msk [vmem:[%s289 + $0x68] sm:$0xf] %vm1299, %v1293
      %1327 = vst.msk [vmem:[%s289 + $0x6c] sm:$0xf] %vm1299, %v1294
      %1328 = vst.msk [vmem:[%s289 + $0x70] sm:$0xf] %vm1299, %v1295
      %1329 = vst.msk [vmem:[%s289 + $0x74] sm:$0xf] %vm1299, %v1296
      %1330 = vst.msk [vmem:[%s289 + $0x78] sm:$0xf] %vm1299, %v1297
      %1331 = vst.msk [vmem:[%s289 + $0x7c] sm:$0xf] %vm1299, %v1298
      %v1332 = vsel %vm871, %v1188, 0.0
      %v1333 = vsel %vm871, %v1190, 0.0
      %v1334 = vadd.f32 %v1332, %v1333
      %v1335 = vsel %vm871, %v1193, 0.0
      %v1336 = vadd.f32 %v1334, %v1335
      %v1337 = vsel %vm871, %v1195, 0.0
      %v1338 = vadd.f32 %v1336, %v1337
      %v1339 = vsel %vm871, %v1198, 0.0
      %v1340 = vadd.f32 %v1338, %v1339
      %v1341 = vsel %vm871, %v1200, 0.0
      %v1342 = vadd.f32 %v1340, %v1341
      %v1343 = vsel %vm871, %v1203, 0.0
      %v1344 = vadd.f32 %v1342, %v1343
      %v1345 = vsel %vm871, %v1205, 0.0
      %v1346 = vadd.f32 %v1344, %v1345
      %v1347 = vsel %vm871, %v1208, 0.0
      %v1348 = vadd.f32 %v1346, %v1347
      %v1349 = vsel %vm871, %v1210, 0.0
      %v1350 = vadd.f32 %v1348, %v1349
      %v1351 = vsel %vm871, %v1213, 0.0
      %v1352 = vadd.f32 %v1350, %v1351
      %v1353 = vsel %vm871, %v1215, 0.0
      %v1354 = vadd.f32 %v1352, %v1353
      %v1355 = vsel %vm871, %v1218, 0.0
      %v1356 = vadd.f32 %v1354, %v1355
      %v1357 = vsel %vm871, %v1220, 0.0
      %v1358 = vadd.f32 %v1356, %v1357
      %v1359 = vsel %vm871, %v1223, 0.0
      %v1360 = vadd.f32 %v1358, %v1359
      %v1361 = vsel %vm871, %v1225, 0.0
      %v1362 = vadd.f32 %v1360, %v1361
      %v1363 = vsel %vm871, %v1228, 0.0
      %v1364 = vadd.f32 %v1362, %v1363
      %v1365 = vsel %vm871, %v1230, 0.0
      %v1366 = vadd.f32 %v1364, %v1365
      %v1367 = vsel %vm871, %v1233, 0.0
      %v1368 = vadd.f32 %v1366, %v1367
      %v1369 = vsel %vm871, %v1235, 0.0
      %v1370 = vadd.f32 %v1368, %v1369
      %v1371 = vsel %vm871, %v1238, 0.0
      %v1372 = vadd.f32 %v1370, %v1371
      %v1373 = vsel %vm871, %v1240, 0.0
      %v1374 = vadd.f32 %v1372, %v1373
      %v1375 = vsel %vm871, %v1243, 0.0
      %v1376 = vadd.f32 %v1374, %v1375
      %v1377 = vsel %vm871, %v1245, 0.0
      %v1378 = vadd.f32 %v1376, %v1377
      %v1379 = vsel %vm871, %v1248, 0.0
      %v1380 = vadd.f32 %v1378, %v1379
      %v1381 = vsel %vm871, %v1250, 0.0
      %v1382 = vadd.f32 %v1380, %v1381
      %v1383 = vsel %vm871, %v1253, 0.0
      %v1384 = vadd.f32 %v1382, %v1383
      %v1385 = vsel %vm871, %v1255, 0.0
      %v1386 = vadd.f32 %v1384, %v1385
      %v1387 = vsel %vm871, %v1258, 0.0
      %v1388 = vadd.f32 %v1386, %v1387
      %v1389 = vsel %vm871, %v1260, 0.0
      %v1390 = vadd.f32 %v1388, %v1389
      %v1391 = vsel %vm871, %v1263, 0.0
      %v1392 = vadd.f32 %v1390, %v1391
      %v1393 = vsel %vm871, %v1265, 0.0
      %v1394 = vadd.f32 %v1392, %v1393
      %v1395 = vrot.slane %v1394, 4
      %v1396 = vadd.f32 %v1394, %v1395
      %v1397 = vrot.slane %v1396, 2
      %v1398 = vadd.f32 %v1396, %v1397
      %v1399 = vrot.slane %v1398, 1
      %v1400 = vadd.f32 %v1398, %v1399
      %v1401 = vrcp.pop 256.0
      %v1402 = vmul.f32 256.0, %v1401
      %v1403 = vsub.f32 1.0, %v1402
      %v1404 = vmul.f32 %v1401, %v1403
      %v1405 = vadd.f32 %v1401, %v1404
      %vm1406 = vweird.f32 %v1401
      %v1407 = vsel %vm1406, %v1401, %v1405
      %v1408 = vmul.f32 %v1400, %v1407
      %v1409 = vsub.f32 %v1188, %v1408
      %v1410 = vsub.f32 %v1190, %v1408
      %v1411 = vsub.f32 %v1193, %v1408
      %v1412 = vsub.f32 %v1195, %v1408
      %v1413 = vsub.f32 %v1198, %v1408
      %v1414 = vsub.f32 %v1200, %v1408
      %v1415 = vsub.f32 %v1203, %v1408
      %v1416 = vsub.f32 %v1205, %v1408
      %v1417 = vsub.f32 %v1208, %v1408
      %v1418 = vsub.f32 %v1210, %v1408
      %v1419 = vsub.f32 %v1213, %v1408
      %v1420 = vsub.f32 %v1215, %v1408
      %v1421 = vsub.f32 %v1218, %v1408
      %v1422 = vsub.f32 %v1220, %v1408
      %v1423 = vsub.f32 %v1223, %v1408
      %v1424 = vsub.f32 %v1225, %v1408
      %v1425 = vsub.f32 %v1228, %v1408
      %v1426 = vsub.f32 %v1230, %v1408
      %v1427 = vsub.f32 %v1233, %v1408
      %v1428 = vsub.f32 %v1235, %v1408
      %v1429 = vsub.f32 %v1238, %v1408
      %v1430 = vsub.f32 %v1240, %v1408
      %v1431 = vsub.f32 %v1243, %v1408
      %v1432 = vsub.f32 %v1245, %v1408
      %v1433 = vsub.f32 %v1248, %v1408
      %v1434 = vsub.f32 %v1250, %v1408
      %v1435 = vsub.f32 %v1253, %v1408
      %v1436 = vsub.f32 %v1255, %v1408
      %v1437 = vsub.f32 %v1258, %v1408
      %v1438 = vsub.f32 %v1260, %v1408
      %v1439 = vsub.f32 %v1263, %v1408
      %v1440 = vsub.f32 %v1265, %v1408
      %vm1441 = vcmask 57344
      %1442 = vst.msk [vmem:[%s292] sm:$0x1] %vm1441, %v1408
      %v1443 = vmul.f32 %v1409, %v1409
      %v1444 = vmul.f32 %v1410, %v1410
      %v1445 = vmul.f32 %v1411, %v1411
      %v1446 = vmul.f32 %v1412, %v1412
      %v1447 = vmul.f32 %v1413, %v1413
      %v1448 = vmul.f32 %v1414, %v1414
      %v1449 = vmul.f32 %v1415, %v1415
      %v1450 = vmul.f32 %v1416, %v1416
      %v1451 = vmul.f32 %v1417, %v1417
      %v1452 = vmul.f32 %v1418, %v1418
      %v1453 = vmul.f32 %v1419, %v1419
      %v1454 = vmul.f32 %v1420, %v1420
      %v1455 = vmul.f32 %v1421, %v1421
      %v1456 = vmul.f32 %v1422, %v1422
      %v1457 = vmul.f32 %v1423, %v1423
      %v1458 = vmul.f32 %v1424, %v1424
      %v1459 = vmul.f32 %v1425, %v1425
      %v1460 = vmul.f32 %v1426, %v1426
      %v1461 = vmul.f32 %v1427, %v1427
      %v1462 = vmul.f32 %v1428, %v1428
      %v1463 = vmul.f32 %v1429, %v1429
      %v1464 = vmul.f32 %v1430, %v1430
      %v1465 = vmul.f32 %v1431, %v1431
      %v1466 = vmul.f32 %v1432, %v1432
      %v1467 = vmul.f32 %v1433, %v1433
      %v1468 = vmul.f32 %v1434, %v1434
      %v1469 = vmul.f32 %v1435, %v1435
      %v1470 = vmul.f32 %v1436, %v1436
      %v1471 = vmul.f32 %v1437, %v1437
      %v1472 = vmul.f32 %v1438, %v1438
      %v1473 = vmul.f32 %v1439, %v1439
      %v1474 = vmul.f32 %v1440, %v1440
      %v1475 = vsel %vm871, %v1443, 0.0
      %v1476 = vsel %vm871, %v1444, 0.0
      %v1477 = vadd.f32 %v1475, %v1476
      %v1478 = vsel %vm871, %v1445, 0.0
      %v1479 = vadd.f32 %v1477, %v1478
      %v1480 = vsel %vm871, %v1446, 0.0
      %v1481 = vadd.f32 %v1479, %v1480
      %v1482 = vsel %vm871, %v1447, 0.0
      %v1483 = vadd.f32 %v1481, %v1482
      %v1484 = vsel %vm871, %v1448, 0.0
      %v1485 = vadd.f32 %v1483, %v1484
      %v1486 = vsel %vm871, %v1449, 0.0
      %v1487 = vadd.f32 %v1485, %v1486
      %v1488 = vsel %vm871, %v1450, 0.0
      %v1489 = vadd.f32 %v1487, %v1488
      %v1490 = vsel %vm871, %v1451, 0.0
      %v1491 = vadd.f32 %v1489, %v1490
      %v1492 = vsel %vm871, %v1452, 0.0
      %v1493 = vadd.f32 %v1491, %v1492
      %v1494 = vsel %vm871, %v1453, 0.0
      %v1495 = vadd.f32 %v1493, %v1494
      %v1496 = vsel %vm871, %v1454, 0.0
      %v1497 = vadd.f32 %v1495, %v1496
      %v1498 = vsel %vm871, %v1455, 0.0
      %v1499 = vadd.f32 %v1497, %v1498
      %v1500 = vsel %vm871, %v1456, 0.0
      %v1501 = vadd.f32 %v1499, %v1500
      %v1502 = vsel %vm871, %v1457, 0.0
      %v1503 = vadd.f32 %v1501, %v1502
      %v1504 = vsel %vm871, %v1458, 0.0
      %v1505 = vadd.f32 %v1503, %v1504
      %v1506 = vsel %vm871, %v1459, 0.0
      %v1507 = vadd.f32 %v1505, %v1506
      %v1508 = vsel %vm871, %v1460, 0.0
      %v1509 = vadd.f32 %v1507, %v1508
      %v1510 = vsel %vm871, %v1461, 0.0
      %v1511 = vadd.f32 %v1509, %v1510
      %v1512 = vsel %vm871, %v1462, 0.0
      %v1513 = vadd.f32 %v1511, %v1512
      %v1514 = vsel %vm871, %v1463, 0.0
      %v1515 = vadd.f32 %v1513, %v1514
      %v1516 = vsel %vm871, %v1464, 0.0
      %v1517 = vadd.f32 %v1515, %v1516
      %v1518 = vsel %vm871, %v1465, 0.0
      %v1519 = vadd.f32 %v1517, %v1518
      %v1520 = vsel %vm871, %v1466, 0.0
      %v1521 = vadd.f32 %v1519, %v1520
      %v1522 = vsel %vm871, %v1467, 0.0
      %v1523 = vadd.f32 %v1521, %v1522
      %v1524 = vsel %vm871, %v1468, 0.0
      %v1525 = vadd.f32 %v1523, %v1524
      %v1526 = vsel %vm871, %v1469, 0.0
      %v1527 = vadd.f32 %v1525, %v1526
      %v1528 = vsel %vm871, %v1470, 0.0
      %v1529 = vadd.f32 %v1527, %v1528
      %v1530 = vsel %vm871, %v1471, 0.0
      %v1531 = vadd.f32 %v1529, %v1530
      %v1532 = vsel %vm871, %v1472, 0.0
      %v1533 = vadd.f32 %v1531, %v1532
      %v1534 = vsel %vm871, %v1473, 0.0
      %v1535 = vadd.f32 %v1533, %v1534
      %v1536 = vsel %vm871, %v1474, 0.0
      %v1537 = vadd.f32 %v1535, %v1536
      %v1538 = vrot.slane %v1537, 4
      %v1539 = vadd.f32 %v1537, %v1538
      %v1540 = vrot.slane %v1539, 2
      %v1541 = vadd.f32 %v1539, %v1540
      %v1542 = vrot.slane %v1541, 1
      %v1543 = vadd.f32 %v1541, %v1542
      %1544 = vst.msk [vmem:[%s295] sm:$0x1] %vm1441, %v1543
      %p1545 = scmp.lt.s32.totalorder %s19, 1
      %s1546 = scalar_select %p1545, %s19, 1
      %s1547 = smul.addr %s1546, 32
      %s1548 = smul.addr %s1547, 4
      %s1549 = scalar_lea.vmem %s5, %s1548
      %p1550 = scmp.lt.s32.totalorder %s19, 1
      %s1551 = scalar_select %p1550, %s19, 1
      %s1552 = scalar_lea.vmem %s6, %s1551
      %p1553 = scmp.lt.s32.totalorder %s19, 1
      %s1554 = scalar_select %p1553, %s19, 1
      %s1555 = scalar_lea.vmem %s7, %s1554
      // Predicated region
      $region41: #{conv_block_x2.3} parent=39 // pred_check
        %p1556 = pneg %p147
      $region42: #{conv_block_x2.3} parent=39 // pred_check_branch
        %1558 = sbr.rel (%p1556) target = $region44
      $region43: #{conv_block_x2.3} parent=39 // pred_region
        _
      $region44: #{conv_block_x2.3} parent=39 // pred_fallthru
        _
      // Predicated region
      $region45: #{conv_block_x2.3} parent=39 // pred_check
        %p1559 = pneg %p173
      $region46: #{conv_block_x2.3} parent=39 // pred_check_branch
        %1561 = sbr.rel (%p1559) target = $region48
      $region47: #{conv_block_x2.3} parent=39 // pred_region
        _
      $region48: #{conv_block_x2.3} parent=39 // pred_fallthru
        _
      // Predicated region
      $region49: #{conv_block_x2.3} parent=39 // pred_check
        %p1562 = pneg %p199
      $region50: #{conv_block_x2.3} parent=39 // pred_check_branch
        %1564 = sbr.rel (%p1562) target = $region52
      $region51: #{conv_block_x2.3} parent=39 // pred_region
        _
      $region52: #{conv_block_x2.3} parent=39 // pred_fallthru
        _
    $region40: #{conv_block_x2.3} parent=5 // pred_fallthru
      _
    %p1565 = scmp.le.s32.totalorder 2, %s14
    // Predicated region
    $region53: #{conv_block_x2.3} parent=5 // pred_check
      %p1566 = pneg %p1565
    $region54: #{conv_block_x2.3} parent=5 // pred_check_branch
      %1568 = sbr.rel (%p1566) target = $region56
    $region55: #{conv_block_x2.3} parent=5 // pred_region
      %s1569 = ssub.s32 %s14, 2
      // Predicated region
      $region57: #{conv_block_x2.3} parent=55 // pred_check
        %p1570 = pneg %p153
      $region58: #{conv_block_x2.3} parent=55 // pred_check_branch
        %1572 = sbr.rel (%p1570) target = $region60
      $region59: #{conv_block_x2.3} parent=55 // pred_region
        %p1573 = scmp.lt.s32.totalorder %s20, 1
        %s1574 = scalar_select %p1573, %s20, 1
        %s1575 = smul.addr %s1574, 32
        %s1576 = smul.addr %s1575, 4
        %s1577 = scalar_lea.vmem %s5, %s1576
      $region60: #{conv_block_x2.3} parent=55 // pred_fallthru
        _
      // Predicated region
      $region61: #{conv_block_x2.3} parent=55 // pred_check
        %p1578 = pneg %p179
      $region62: #{conv_block_x2.3} parent=55 // pred_check_branch
        %1580 = sbr.rel (%p1578) target = $region64
      $region63: #{conv_block_x2.3} parent=55 // pred_region
        %p1581 = scmp.lt.s32.totalorder %s20, 1
        %s1582 = scalar_select %p1581, %s20, 1
        %s1583 = scalar_lea.vmem %s6, %s1582
      $region64: #{conv_block_x2.3} parent=55 // pred_fallthru
        _
      // Predicated region
      $region65: #{conv_block_x2.3} parent=55 // pred_check
        %p1584 = pneg %p205
      $region66: #{conv_block_x2.3} parent=55 // pred_check_branch
        %1586 = sbr.rel (%p1584) target = $region68
      $region67: #{conv_block_x2.3} parent=55 // pred_region
        %p1587 = scmp.lt.s32.totalorder %s20, 1
        %s1588 = scalar_select %p1587, %s20, 1
        %s1589 = scalar_lea.vmem %s7, %s1588
      $region68: #{conv_block_x2.3} parent=55 // pred_fallthru
        _
    $region56: #{conv_block_x2.3} parent=5 // pred_fallthru
      _
  $region6: #{conv_block_x2.3} parent=0 // loop_footer
    %s18 = sadd.s32 1, %s14
  $region7: #{conv_block_x2.3} parent=0 // loop_footer_branch
    %13 = sbr.rel target = $region3
  $region8: #{conv_block_x2.3} parent=0 // loop_exit
    _

</llo_original>
